<compile_context>
chip_gen: v6e
topology: v6e:2x2x1
jax: 0.10.0
libtpu: 0.0.40
codegen_flags: <defaults>
</compile_context>

<pallas_src>
import math

import jax
import jax.numpy as jnp
from jax.experimental import pallas as pl
from jax.experimental.pallas import tpu as pltpu

# ---- small, module-consistent shapes -----------------------------------
B = 2          # batch
T = 8          # time
D = 32         # input_dim
H = 4          # attention heads
DK = D // H    # per-head dim
DFF = 64       # feed-forward hidden dim
EPS = 1e-5

WCOLS = 4 * D + DFF          # packed weight/bias slab width: [kv | q | wo | w1]
NEG_INF = -1e9


# ------------------------- Pallas kernel --------------------------------
def encoder_layer_kernel(lens_ref,                 # SMEM scalar prefetch (B,)
                         x_ref, w_ref, w2_ref, b_ref,
                         y_ref, cache_ref):
    x = x_ref[...]                                   # (B*T, D) f32
    W = w_ref[...]                                   # (D, 4D+DFF)
    bslab = b_ref[...]                               # (6, 4D+DFF)

    # static slices of the packed slabs (column layout: [kv | q | wo | w1])
    wkvq = W[:, :3 * D]                              # (D, 3D)  [k|v interleaved, q]
    wo = W[:, 3 * D:4 * D]                           # (D, D)
    w1 = W[:, 4 * D:]                                # (D, DFF)
    bkvq = bslab[0:1, :3 * D]                        # (1, 3D)
    bo = bslab[0:1, 3 * D:4 * D]                     # (1, D)
    bf1 = bslab[0:1, 4 * D:]                         # (1, DFF)
    g1, be1 = bslab[1:2, :D], bslab[2:3, :D]
    g2, be2 = bslab[3:4, :D], bslab[4:5, :D]
    bf2 = bslab[5:6, :D]

    def layer_norm(v, g, b):
        mu = jnp.mean(v, axis=-1, keepdims=True)
        var = jnp.mean((v - mu) ** 2, axis=-1, keepdims=True)
        return (v - mu) * jax.lax.rsqrt(var + EPS) * g + b

    # ---- self-attention block (pre-norm) ----
    xn = layer_norm(x, g1, be1)                      # (B*T, D)

    # single fused [K|V|Q] projection over the flattened batch (one MXU matmul);
    # q columns were pre-scaled by 1/sqrt(dk) in the wrapper (exact, free).
    kvq = jnp.dot(xn, wkvq, preferred_element_type=jnp.float32) + bkvq   # (B*T, 3D)

    # attention cache = per-head [k|v]: lane-0-aligned prefix, single store
    cache_ref[...] = kvq[:, :2 * D].astype(cache_ref.dtype)

    # head-major (B*H, T, dk) views for batched attention
    kv4 = jnp.transpose(kvq[:, :2 * D].reshape(B, T, H, 2 * DK), (0, 2, 1, 3))
    k3 = kv4[..., :DK].reshape(B * H, T, DK)
    v3 = kv4[..., DK:].reshape(B * H, T, DK)
    q3 = jnp.transpose(kvq[:, 2 * D:].reshape(B, T, H, DK),
                       (0, 2, 1, 3)).reshape(B * H, T, DK)

    # additive mask bias + padded-query-row mask, built once from per-batch lens
    row = jax.lax.broadcasted_iota(jnp.int32, (T, T), 0)   # query index
    col = jax.lax.broadcasted_iota(jnp.int32, (T, T), 1)   # key index
    bias_rows, qmask_rows = [], []
    for b in range(B):                                     # B == 2, tiny VPU work
        lb = lens_ref[b]
        valid = (row < lb) & (col < lb)
        bias_rows.append(jnp.where(valid, 0.0, NEG_INF))          # (T, T)
        qmask_rows.append(jnp.where(row[:, :1] < lb, 1.0, 0.0))   # (T, 1)
    mbias = jnp.stack(bias_rows)[:, None]                  # (B, 1, T, T)
    qmask = jnp.stack(qmask_rows)[:, None]                 # (B, 1, T, 1)

    scores = jnp.einsum("bqd,bkd->bqk", q3, k3,
                        preferred_element_type=jnp.float32)        # (B*H, T, T)
    scores = scores.reshape(B, H, T, T) + mbias
    smax = jnp.max(scores, axis=-1, keepdims=True)
    p = jnp.exp(scores - smax)
    attn = p / jnp.sum(p, axis=-1, keepdims=True)          # exact divide (tiny)
    attn = (attn * qmask).reshape(B * H, T, T)             # zero padded query rows

    ctx = jnp.einsum("bqk,bkd->bqd", attn, v3,
                     preferred_element_type=jnp.float32)           # (B*H, T, DK)
    ctx = jnp.transpose(ctx.reshape(B, H, T, DK), (0, 2, 1, 3)).reshape(B * T, D)

    att = jnp.dot(ctx, wo, preferred_element_type=jnp.float32) + bo
    x1 = x + att                                           # residual

    # ---- feed-forward block (pre-norm) ----
    x2 = layer_norm(x1, g2, be2)
    h1 = jnp.maximum(jnp.dot(x2, w1, preferred_element_type=jnp.float32) + bf1, 0.0)
    ff = jnp.dot(h1, w2_ref[...], preferred_element_type=jnp.float32) + bf2

    y_ref[...] = (x1 + ff).astype(y_ref.dtype)


# ------------------------------ wrapper ----------------------------------
def _pack_params(p):
    """Wrapper-side (XLA) repacking of torch-style params; free layout plumbing."""
    scale = 1.0 / math.sqrt(DK)
    wq = p["wq"] * scale                     # fold 1/sqrt(dk) into q projection
    bq = p["bq"] * scale

    # per-head interleaved [k_h | v_h] columns -> cache is a prefix slice
    wkv = jnp.concatenate([p["wk"].reshape(D, H, DK),
                           p["wv"].reshape(D, H, DK)], axis=-1).reshape(D, 2 * D)
    w_in = jnp.concatenate([wkv, wq, p["wo"], p["w1"]], axis=1)      # (D, 4D+DFF)

    bkv = jnp.concatenate([p["bk"].reshape(1, H, DK),
                           p["bv"].reshape(1, H, DK)], axis=-1).reshape(1, 2 * D)
    row0 = jnp.concatenate([bkv, bq, p["bo"], p["bf1"]], axis=1)     # (1, 4D+DFF)

    def pad_row(v):                                                  # (1,D)->(1,4D+DFF)
        return jnp.pad(v, ((0, 0), (0, WCOLS - D)))

    bias_slab = jnp.concatenate(
        [row0, pad_row(p["g1"]), pad_row(p["be1"]),
         pad_row(p["g2"]), pad_row(p["be2"]), pad_row(p["bf2"])], axis=0)  # (6, 4D+DFF)

    return w_in, p["w2"], bias_slab


def transformer_encoder_layer(x, lens, params):
    """x: (B, T, D) f32; lens: (B,) int32 valid lengths (padding mask)."""
    w_in, w2, bias_slab = _pack_params(params)
    lens = lens.astype(jnp.int32)
    x_flat = x.reshape(B * T, D)                       # reshape outside the kernel

    grid_spec = pltpu.PrefetchScalarGridSpec(
        num_scalar_prefetch=1,
        grid=(1,),
        in_specs=[
            pl.BlockSpec((B * T, D), lambda i, lens: (0, 0)),        # x (flattened)
            pl.BlockSpec((D, WCOLS), lambda i, lens: (0, 0)),        # [Wkv|Wq|Wo|W1]
            pl.BlockSpec((DFF, D), lambda i, lens: (0, 0)),          # W2
            pl.BlockSpec((6, WCOLS), lambda i, lens: (0, 0)),        # biases + LN vecs
        ],
        out_specs=[
            pl.BlockSpec((B * T, D), lambda i, lens: (0, 0)),        # y (flattened)
            pl.BlockSpec((B * T, 2 * D), lambda i, lens: (0, 0)),    # att cache slab
        ],
    )

    y_flat, cache_flat = pl.pallas_call(
        encoder_layer_kernel,
        grid_spec=grid_spec,
        out_shape=(
            jax.ShapeDtypeStruct((B * T, D), jnp.float32),
            jax.ShapeDtypeStruct((B * T, 2 * D), jnp.float32),
        ),
        compiler_params=pltpu.CompilerParams(
            dimension_semantics=("arbitrary",)),
    )(lens, x_flat, w_in, w2, bias_slab)

    y = y_flat.reshape(B, T, D)
    # (B*T, 2D) [per head k|v] -> (B, H, T, 2*dk): free XLA plumbing
    new_att_cache = jnp.transpose(cache_flat.reshape(B, T, H, 2 * DK), (0, 2, 1, 3))

    # Rebuild the boolean mask the module would return.
    valid = jnp.arange(T)[None, :] < lens[:, None]               # (B, T)
    mask_bool = valid[:, None, :] & valid[:, :, None]            # (B, T, T)
    fake_cnn_cache = jnp.zeros((0, 0, 0), dtype=y.dtype)
    return y, mask_bool, new_att_cache, fake_cnn_cache


# ------------------------- pure-JAX reference -----------------------------
def reference(x, mask_bool, p):
    m = mask_bool.astype(jnp.float32)

    def ln(v, g, b):
        mu = jnp.mean(v, -1, keepdims=True)
        var = jnp.mean((v - mu) ** 2, -1, keepdims=True)
        return (v - mu) / jnp.sqrt(var + EPS) * g + b

    xn = ln(x, p["g1"], p["be1"])
    q = xn @ p["wq"] + p["bq"]
    k = xn @ p["wk"] + p["bk"]
    v = xn @ p["wv"] + p["bv"]
    qh = q.reshape(B, T, H, DK).transpose(0, 2, 1, 3)
    kh = k.reshape(B, T, H, DK).transpose(0, 2, 1, 3)
    vh = v.reshape(B, T, H, DK).transpose(0, 2, 1, 3)
    scores = jnp.einsum("bhqd,bhkd->bhqk", qh, kh) / math.sqrt(DK)
    scores = jnp.where(m[:, None] > 0, scores, -1e9)
    attn = jax.nn.softmax(scores, -1) * m[:, None]
    ctx = jnp.einsum("bhqk,bhkd->bhqd", attn, vh)
    ctx = ctx.transpose(0, 2, 1, 3).reshape(B, T, D)
    x1 = x + ctx @ p["wo"] + p["bo"]
    x2 = ln(x1, p["g2"], p["be2"])
    ff = jnp.maximum(x2 @ p["w1"] + p["bf1"], 0.0) @ p["w2"] + p["bf2"]
    cache = jnp.concatenate([kh, vh], axis=-1)
    return x1 + ff, cache


# -------------------------------- main -------------------------------------
if __name__ == "__main__":
    key = jax.random.PRNGKey(0)
    keys = jax.random.split(key, 16)

    def init(k, shape, scale):
        return jax.random.normal(k, shape, jnp.float32) * scale

    params = {
        "wq": init(keys[0], (D, D), 1.0 / math.sqrt(D)),
        "bq": init(keys[1], (1, D), 0.02),
        "wk": init(keys[2], (D, D), 1.0 / math.sqrt(D)),
        "bk": init(keys[3], (1, D), 0.02),
        "wv": init(keys[4], (D, D), 1.0 / math.sqrt(D)),
        "bv": init(keys[5], (1, D), 0.02),
        "wo": init(keys[6], (D, D), 1.0 / math.sqrt(D)),
        "bo": init(keys[7], (1, D), 0.02),
        "g1": jnp.ones((1, D), jnp.float32),
        "be1": jnp.zeros((1, D), jnp.float32),
        "g2": jnp.ones((1, D), jnp.float32),
        "be2": jnp.zeros((1, D), jnp.float32),
        "w1": init(keys[8], (D, DFF), 1.0 / math.sqrt(D)),
        "bf1": init(keys[9], (1, DFF), 0.02),
        "w2": init(keys[10], (DFF, D), 1.0 / math.sqrt(DFF)),
        "bf2": init(keys[11], (1, D), 0.02),
    }

    x = jax.random.normal(keys[12], (B, T, D), jnp.float32)
    # padding mask: batch 0 fully valid, batch 1 valid for first 6 frames
    lens = jnp.array([T, T - 2], dtype=jnp.int32)

    y, mask_out, new_att_cache, cnn_cache = jax.block_until_ready(
        transformer_encoder_layer(x, lens, params))

    y_ref, cache_expected = reference(x, mask_out, params)
    assert y.shape == (B, T, D) and new_att_cache.shape == (B, H, T, 2 * DK)
    assert mask_out.shape == (B, T, T) and cnn_cache.shape == (0, 0, 0)
    # all-f32 matmuls + exact softmax -> tight tolerances
    assert jnp.allclose(y, y_ref, atol=1e-3, rtol=1e-3)
    assert jnp.allclose(new_att_cache, cache_expected, atol=1e-4, rtol=1e-4)

    print("KERNEL_OK")
</pallas_src>

<mosaic_0001>
module attributes {stable_mosaic.version = 11 : i64} {
  func.func @encoder_layer_kernel(%arg0: i32, %arg1: memref<2xi32, #tpu.memory_space<smem>>, %arg2: memref<16x32xf32, #tpu.memory_space<vmem>>, %arg3: memref<32x192xf32, #tpu.memory_space<vmem>>, %arg4: memref<64x32xf32, #tpu.memory_space<vmem>>, %arg5: memref<6x192xf32, #tpu.memory_space<vmem>>, %arg6: memref<16x32xf32, #tpu.memory_space<vmem>>, %arg7: memref<16x64xf32, #tpu.memory_space<vmem>>) attributes {dimension_semantics = [#tpu.dimension_semantics<arbitrary>], iteration_bounds = array<i64: 1>, scalar_prefetch = 1 : i64, scratch_operands = 0 : i64, tpu.core_type = #tpu.core_type<tc>, window_params = [{pipeline_mode = #tpu.pipeline_mode<synchronous>, transform_indices = @transform_0, window_bounds = array<i64: 16, 32>}, {pipeline_mode = #tpu.pipeline_mode<synchronous>, transform_indices = @transform_1, window_bounds = array<i64: 32, 192>}, {pipeline_mode = #tpu.pipeline_mode<synchronous>, transform_indices = @transform_2, window_bounds = array<i64: 64, 32>}, {pipeline_mode = #tpu.pipeline_mode<synchronous>, transform_indices = @transform_3, window_bounds = array<i64: 6, 192>}, {pipeline_mode = #tpu.pipeline_mode<synchronous>, transform_indices = @transform_4, window_bounds = array<i64: 16, 32>}, {pipeline_mode = #tpu.pipeline_mode<synchronous>, transform_indices = @transform_5, window_bounds = array<i64: 16, 64>}]} {
    %c0 = arith.constant 0 : index
    %c0_0 = arith.constant 0 : index
    %0 = vector.load %arg2[%c0, %c0_0] : memref<16x32xf32, #tpu.memory_space<vmem>>, vector<16x32xf32>
    %c0_1 = arith.constant 0 : index
    %c0_2 = arith.constant 0 : index
    %1 = vector.load %arg3[%c0_1, %c0_2] : memref<32x192xf32, #tpu.memory_space<vmem>>, vector<32x192xf32>
    %c0_3 = arith.constant 0 : index
    %c0_4 = arith.constant 0 : index
    %2 = vector.load %arg5[%c0_3, %c0_4] : memref<6x192xf32, #tpu.memory_space<vmem>>, vector<6x192xf32>
    %3 = vector.extract_strided_slice %1 {offsets = [0, 0], sizes = [32, 96], strides = [1, 1]} : vector<32x192xf32> to vector<32x96xf32>
    %4 = vector.extract_strided_slice %1 {offsets = [0, 96], sizes = [32, 32], strides = [1, 1]} : vector<32x192xf32> to vector<32x32xf32>
    %5 = vector.extract_strided_slice %1 {offsets = [0, 128], sizes = [32, 64], strides = [1, 1]} : vector<32x192xf32> to vector<32x64xf32>
    %6 = vector.extract_strided_slice %2 {offsets = [0, 0], sizes = [1, 96], strides = [1, 1]} : vector<6x192xf32> to vector<1x96xf32>
    %7 = vector.extract_strided_slice %2 {offsets = [0, 96], sizes = [1, 32], strides = [1, 1]} : vector<6x192xf32> to vector<1x32xf32>
    %8 = vector.extract_strided_slice %2 {offsets = [0, 128], sizes = [1, 64], strides = [1, 1]} : vector<6x192xf32> to vector<1x64xf32>
    %9 = vector.extract_strided_slice %2 {offsets = [1, 0], sizes = [1, 32], strides = [1, 1]} : vector<6x192xf32> to vector<1x32xf32>
    %10 = vector.extract_strided_slice %2 {offsets = [2, 0], sizes = [1, 32], strides = [1, 1]} : vector<6x192xf32> to vector<1x32xf32>
    %11 = vector.extract_strided_slice %2 {offsets = [3, 0], sizes = [1, 32], strides = [1, 1]} : vector<6x192xf32> to vector<1x32xf32>
    %12 = vector.extract_strided_slice %2 {offsets = [4, 0], sizes = [1, 32], strides = [1, 1]} : vector<6x192xf32> to vector<1x32xf32>
    %13 = vector.extract_strided_slice %2 {offsets = [5, 0], sizes = [1, 32], strides = [1, 1]} : vector<6x192xf32> to vector<1x32xf32>
    %cst = arith.constant dense<0.000000e+00> : vector<16xf32>
    %14 = vector.multi_reduction <add>, %0, %cst [1] : vector<16x32xf32> to vector<16xf32>
    %15 = vector.shape_cast %14 : vector<16xf32> to vector<16x1xf32>
    %cst_5 = arith.constant 3.200000e+01 : f32
    %16 = vector.broadcast %cst_5 : f32 to vector<16x1xf32>
    %17 = arith.divf %15, %16 : vector<16x1xf32>
    %18 = vector.broadcast %17 : vector<16x1xf32> to vector<16x32xf32>
    %19 = arith.subf %0, %18 : vector<16x32xf32>
    %20 = arith.mulf %19, %19 : vector<16x32xf32>
    %cst_6 = arith.constant dense<0.000000e+00> : vector<16xf32>
    %21 = vector.multi_reduction <add>, %20, %cst_6 [1] : vector<16x32xf32> to vector<16xf32>
    %22 = vector.shape_cast %21 : vector<16xf32> to vector<16x1xf32>
    %cst_7 = arith.constant 3.200000e+01 : f32
    %23 = vector.broadcast %cst_7 : f32 to vector<16x1xf32>
    %24 = arith.divf %22, %23 : vector<16x1xf32>
    %25 = vector.broadcast %17 : vector<16x1xf32> to vector<16x32xf32>
    %26 = arith.subf %0, %25 : vector<16x32xf32>
    %cst_8 = arith.constant 9.99999974E-6 : f32
    %27 = vector.broadcast %cst_8 : f32 to vector<16x1xf32>
    %28 = arith.addf %24, %27 : vector<16x1xf32>
    %29 = math.rsqrt %28 : vector<16x1xf32>
    %30 = vector.broadcast %29 : vector<16x1xf32> to vector<16x32xf32>
    %31 = arith.mulf %26, %30 : vector<16x32xf32>
    %32 = vector.broadcast %9 : vector<1x32xf32> to vector<16x32xf32>
    %33 = arith.mulf %31, %32 : vector<16x32xf32>
    %34 = vector.broadcast %10 : vector<1x32xf32> to vector<16x32xf32>
    %35 = arith.addf %33, %34 : vector<16x32xf32>
    %cst_9 = arith.constant dense<0.000000e+00> : vector<16x96xf32>
    %36 = tpu.matmul %35, %3, %cst_9 {dimension_numbers = #tpu.dot_dimension_numbers<[1], [0], [0], [1], [0, 0, 1, 1], [], []>} : vector<16x32xf32>, vector<32x96xf32>, vector<16x96xf32> -> vector<16x96xf32>
    %37 = vector.broadcast %6 : vector<1x96xf32> to vector<16x96xf32>
    %38 = arith.addf %36, %37 : vector<16x96xf32>
    %39 = vector.extract_strided_slice %38 {offsets = [0, 0], sizes = [16, 64], strides = [1, 1]} : vector<16x96xf32> to vector<16x64xf32>
    %c0_10 = arith.constant 0 : index
    %c0_11 = arith.constant 0 : index
    %40 = vector.load %arg7[%c0_10, %c0_11] : memref<16x64xf32, #tpu.memory_space<vmem>>, vector<16x64xf32>
    tpu.vector_store %arg7[%c0_10, %c0_11], %39 {strides = array<i32>} : memref<16x64xf32, #tpu.memory_space<vmem>>, vector<16x64xf32>,
    %41 = vector.extract_strided_slice %38 {offsets = [0, 0], sizes = [16, 64], strides = [1, 1]} : vector<16x96xf32> to vector<16x64xf32>
    %42 = vector.shape_cast %41 : vector<16x64xf32> to vector<2x8x4x16xf32>
    %43 = tpu.transpose %42, [0, 2, 1, 3] : vector<2x8x4x16xf32> -> vector<2x4x8x16xf32>
    %44 = vector.extract_strided_slice %43 {offsets = [0, 0, 0, 0], sizes = [2, 4, 8, 8], strides = [1, 1, 1, 1]} : vector<2x4x8x16xf32> to vector<2x4x8x8xf32>
    %45 = vector.shape_cast %44 : vector<2x4x8x8xf32> to vector<8x8x8xf32>
    %46 = vector.extract_strided_slice %43 {offsets = [0, 0, 0, 8], sizes = [2, 4, 8, 8], strides = [1, 1, 1, 1]} : vector<2x4x8x16xf32> to vector<2x4x8x8xf32>
    %47 = vector.shape_cast %46 : vector<2x4x8x8xf32> to vector<8x8x8xf32>
    %48 = vector.extract_strided_slice %38 {offsets = [0, 64], sizes = [16, 32], strides = [1, 1]} : vector<16x96xf32> to vector<16x32xf32>
    %49 = vector.shape_cast %48 : vector<16x32xf32> to vector<2x8x4x8xf32>
    %50 = tpu.transpose %49, [0, 2, 1, 3] : vector<2x8x4x8xf32> -> vector<2x4x8x8xf32>
    %51 = vector.shape_cast %50 : vector<2x4x8x8xf32> to vector<8x8x8xf32>
    %52 = tpu.iota {dimensions = array<i32: 0>} : vector<8x8xi32>
    %53 = tpu.iota {dimensions = array<i32: 1>} : vector<8x8xi32>
    %c0_12 = arith.constant 0 : index
    %54 = memref.load %arg1[%c0_12] : memref<2xi32, #tpu.memory_space<smem>>
    %55 = vector.broadcast %54 : i32 to vector<8x8xi32>
    %56 = arith.cmpi slt, %52, %55 : vector<8x8xi32>
    %57 = vector.broadcast %54 : i32 to vector<8x8xi32>
    %58 = arith.cmpi slt, %53, %57 : vector<8x8xi32>
    %59 = arith.andi %56, %58 : vector<8x8xi1>
    %cst_13 = arith.constant 0.000000e+00 : f32
    %cst_14 = arith.constant -1.000000e+09 : f32
    %60 = vector.broadcast %cst_13 : f32 to vector<8x8xf32>
    %61 = vector.broadcast %cst_14 : f32 to vector<8x8xf32>
    %62 = arith.select %59, %60, %61 : vector<8x8xi1>, vector<8x8xf32>
    %63 = vector.extract_strided_slice %52 {offsets = [0, 0], sizes = [8, 1], strides = [1, 1]} : vector<8x8xi32> to vector<8x1xi32>
    %64 = vector.broadcast %54 : i32 to vector<8x1xi32>
    %65 = arith.cmpi slt, %63, %64 : vector<8x1xi32>
    %cst_15 = arith.constant 1.000000e+00 : f32
    %cst_16 = arith.constant 0.000000e+00 : f32
    %66 = vector.broadcast %cst_15 : f32 to vector<8x1xf32>
    %67 = vector.broadcast %cst_16 : f32 to vector<8x1xf32>
    %68 = arith.select %65, %66, %67 : vector<8x1xi1>, vector<8x1xf32>
    %c1 = arith.constant 1 : index
    %69 = memref.load %arg1[%c1] : memref<2xi32, #tpu.memory_space<smem>>
    %70 = vector.broadcast %69 : i32 to vector<8x8xi32>
    %71 = arith.cmpi slt, %52, %70 : vector<8x8xi32>
    %72 = vector.broadcast %69 : i32 to vector<8x8xi32>
    %73 = arith.cmpi slt, %53, %72 : vector<8x8xi32>
    %74 = arith.andi %71, %73 : vector<8x8xi1>
    %cst_17 = arith.constant 0.000000e+00 : f32
    %cst_18 = arith.constant -1.000000e+09 : f32
    %75 = vector.broadcast %cst_17 : f32 to vector<8x8xf32>
    %76 = vector.broadcast %cst_18 : f32 to vector<8x8xf32>
    %77 = arith.select %74, %75, %76 : vector<8x8xi1>, vector<8x8xf32>
    %78 = vector.extract_strided_slice %52 {offsets = [0, 0], sizes = [8, 1], strides = [1, 1]} : vector<8x8xi32> to vector<8x1xi32>
    %79 = vector.broadcast %69 : i32 to vector<8x1xi32>
    %80 = arith.cmpi slt, %78, %79 : vector<8x1xi32>
    %cst_19 = arith.constant 1.000000e+00 : f32
    %cst_20 = arith.constant 0.000000e+00 : f32
    %81 = vector.broadcast %cst_19 : f32 to vector<8x1xf32>
    %82 = vector.broadcast %cst_20 : f32 to vector<8x1xf32>
    %83 = arith.select %80, %81, %82 : vector<8x1xi1>, vector<8x1xf32>
    %84 = vector.shape_cast %62 : vector<8x8xf32> to vector<1x8x8xf32>
    %85 = vector.shape_cast %77 : vector<8x8xf32> to vector<1x8x8xf32>
    %86 = tpu.concatenate %84, %85 in 0 : vector<1x8x8xf32>, vector<1x8x8xf32> -> vector<2x8x8xf32>
    %87 = vector.shape_cast %86 : vector<2x8x8xf32> to vector<2x1x8x8xf32>
    %88 = vector.shape_cast %68 : vector<8x1xf32> to vector<1x8x1xf32>
    %89 = vector.shape_cast %83 : vector<8x1xf32> to vector<1x8x1xf32>
    %90 = tpu.concatenate %88, %89 in 0 : vector<1x8x1xf32>, vector<1x8x1xf32> -> vector<2x8x1xf32>
    %91 = vector.shape_cast %90 : vector<2x8x1xf32> to vector<2x1x8x1xf32>
    "tpu.trace_start"() <{level = 10 : i32, message = "bqd,bkd->bqk"}> : () -> ()
    %cst_21 = arith.constant dense<0.000000e+00> : vector<8x8x8xf32>
    %92 = tpu.matmul %51, %45, %cst_21 {dimension_numbers = #tpu.dot_dimension_numbers<[2], [2], [1], [1], [0, 0, 0, 1, 1, 1], [0], [0]>} : vector<8x8x8xf32>, vector<8x8x8xf32>, vector<8x8x8xf32> -> vector<8x8x8xf32>
    "tpu.trace_stop"() : () -> ()
    %93 = vector.shape_cast %92 : vector<8x8x8xf32> to vector<2x4x8x8xf32>
    %94 = vector.broadcast %87 : vector<2x1x8x8xf32> to vector<2x4x8x8xf32>
    %95 = arith.addf %93, %94 : vector<2x4x8x8xf32>
    %cst_22 = arith.constant dense<0xFF800000> : vector<2x4x8xf32>
    %96 = vector.multi_reduction <maximumf>, %95, %cst_22 [3] : vector<2x4x8x8xf32> to vector<2x4x8xf32>
    %97 = vector.shape_cast %96 : vector<2x4x8xf32> to vector<2x4x8x1xf32>
    %98 = vector.broadcast %97 : vector<2x4x8x1xf32> to vector<2x4x8x8xf32>
    %99 = arith.subf %95, %98 : vector<2x4x8x8xf32>
    %100 = math.exp %99 : vector<2x4x8x8xf32>
    %cst_23 = arith.constant dense<0.000000e+00> : vector<2x4x8xf32>
    %101 = vector.multi_reduction <add>, %100, %cst_23 [3] : vector<2x4x8x8xf32> to vector<2x4x8xf32>
    %102 = vector.shape_cast %101 : vector<2x4x8xf32> to vector<2x4x8x1xf32>
    %103 = vector.broadcast %102 : vector<2x4x8x1xf32> to vector<2x4x8x8xf32>
    %104 = arith.divf %100, %103 : vector<2x4x8x8xf32>
    %105 = vector.broadcast %91 : vector<2x1x8x1xf32> to vector<2x4x8x8xf32>
    %106 = arith.mulf %104, %105 : vector<2x4x8x8xf32>
    %107 = vector.shape_cast %106 : vector<2x4x8x8xf32> to vector<8x8x8xf32>
    "tpu.trace_start"() <{level = 10 : i32, message = "bqk,bkd->bqd"}> : () -> ()
    %cst_24 = arith.constant dense<0.000000e+00> : vector<8x8x8xf32>
    %108 = tpu.matmul %107, %47, %cst_24 {dimension_numbers = #tpu.dot_dimension_numbers<[2], [1], [1], [2], [0, 0, 0, 1, 1, 2], [0], [0]>} : vector<8x8x8xf32>, vector<8x8x8xf32>, vector<8x8x8xf32> -> vector<8x8x8xf32>
    "tpu.trace_stop"() : () -> ()
    %109 = vector.shape_cast %108 : vector<8x8x8xf32> to vector<2x4x8x8xf32>
    %110 = tpu.transpose %109, [0, 2, 1, 3] : vector<2x4x8x8xf32> -> vector<2x8x4x8xf32>
    %111 = vector.shape_cast %110 : vector<2x8x4x8xf32> to vector<16x32xf32>
    %cst_25 = arith.constant dense<0.000000e+00> : vector<16x32xf32>
    %112 = tpu.matmul %111, %4, %cst_25 {dimension_numbers = #tpu.dot_dimension_numbers<[1], [0], [0], [1], [0, 0, 1, 1], [], []>} : vector<16x32xf32>, vector<32x32xf32>, vector<16x32xf32> -> vector<16x32xf32>
    %113 = vector.broadcast %7 : vector<1x32xf32> to vector<16x32xf32>
    %114 = arith.addf %112, %113 : vector<16x32xf32>
    %115 = arith.addf %0, %114 : vector<16x32xf32>
    %cst_26 = arith.constant dense<0.000000e+00> : vector<16xf32>
    %116 = vector.multi_reduction <add>, %115, %cst_26 [1] : vector<16x32xf32> to vector<16xf32>
    %117 = vector.shape_cast %116 : vector<16xf32> to vector<16x1xf32>
    %cst_27 = arith.constant 3.200000e+01 : f32
    %118 = vector.broadcast %cst_27 : f32 to vector<16x1xf32>
    %119 = arith.divf %117, %118 : vector<16x1xf32>
    %120 = vector.broadcast %119 : vector<16x1xf32> to vector<16x32xf32>
    %121 = arith.subf %115, %120 : vector<16x32xf32>
    %122 = arith.mulf %121, %121 : vector<16x32xf32>
    %cst_28 = arith.constant dense<0.000000e+00> : vector<16xf32>
    %123 = vector.multi_reduction <add>, %122, %cst_28 [1] : vector<16x32xf32> to vector<16xf32>
    %124 = vector.shape_cast %123 : vector<16xf32> to vector<16x1xf32>
    %cst_29 = arith.constant 3.200000e+01 : f32
    %125 = vector.broadcast %cst_29 : f32 to vector<16x1xf32>
    %126 = arith.divf %124, %125 : vector<16x1xf32>
    %127 = vector.broadcast %119 : vector<16x1xf32> to vector<16x32xf32>
    %128 = arith.subf %115, %127 : vector<16x32xf32>
    %cst_30 = arith.constant 9.99999974E-6 : f32
    %129 = vector.broadcast %cst_30 : f32 to vector<16x1xf32>
    %130 = arith.addf %126, %129 : vector<16x1xf32>
    %131 = math.rsqrt %130 : vector<16x1xf32>
    %132 = vector.broadcast %131 : vector<16x1xf32> to vector<16x32xf32>
    %133 = arith.mulf %128, %132 : vector<16x32xf32>
    %134 = vector.broadcast %11 : vector<1x32xf32> to vector<16x32xf32>
    %135 = arith.mulf %133, %134 : vector<16x32xf32>
    %136 = vector.broadcast %12 : vector<1x32xf32> to vector<16x32xf32>
    %137 = arith.addf %135, %136 : vector<16x32xf32>
    %cst_31 = arith.constant dense<0.000000e+00> : vector<16x64xf32>
    %138 = tpu.matmul %137, %5, %cst_31 {dimension_numbers = #tpu.dot_dimension_numbers<[1], [0], [0], [1], [0, 0, 1, 1], [], []>} : vector<16x32xf32>, vector<32x64xf32>, vector<16x64xf32> -> vector<16x64xf32>
    %139 = vector.broadcast %8 : vector<1x64xf32> to vector<16x64xf32>
    %140 = arith.addf %138, %139 : vector<16x64xf32>
    %cst_32 = arith.constant 0.000000e+00 : f32
    %141 = vector.broadcast %cst_32 : f32 to vector<16x64xf32>
    %142 = arith.maximumf %140, %141 : vector<16x64xf32>
    %c0_33 = arith.constant 0 : index
    %c0_34 = arith.constant 0 : index
    %143 = vector.load %arg4[%c0_33, %c0_34] : memref<64x32xf32, #tpu.memory_space<vmem>>, vector<64x32xf32>
    %cst_35 = arith.constant dense<0.000000e+00> : vector<16x32xf32>
    %144 = tpu.matmul %142, %143, %cst_35 {dimension_numbers = #tpu.dot_dimension_numbers<[1], [0], [0], [1], [0, 0, 1, 1], [], []>} : vector<16x64xf32>, vector<64x32xf32>, vector<16x32xf32> -> vector<16x32xf32>
    %145 = vector.broadcast %13 : vector<1x32xf32> to vector<16x32xf32>
    %146 = arith.addf %144, %145 : vector<16x32xf32>
    %147 = arith.addf %115, %146 : vector<16x32xf32>
    %c0_36 = arith.constant 0 : index
    %c0_37 = arith.constant 0 : index
    %148 = vector.load %arg6[%c0_36, %c0_37] : memref<16x32xf32, #tpu.memory_space<vmem>>, vector<16x32xf32>
    tpu.vector_store %arg6[%c0_36, %c0_37], %147 {strides = array<i32>} : memref<16x32xf32, #tpu.memory_space<vmem>>, vector<16x32xf32>,
    return
  }
  func.func @transform_0(%arg0: i32, %arg1: memref<2xi32, #tpu.memory_space<smem>>) -> (i32, i32) {
    %c0_i32 = arith.constant 0 : i32
    %c0_i32_0 = arith.constant 0 : i32
    %c0_i32_1 = arith.constant 0 : i32
    return %c0_i32, %c0_i32_0 : i32, i32
  }
  func.func @transform_1(%arg0: i32, %arg1: memref<2xi32, #tpu.memory_space<smem>>) -> (i32, i32) {
    %c0_i32 = arith.constant 0 : i32
    %c0_i32_0 = arith.constant 0 : i32
    %c0_i32_1 = arith.constant 0 : i32
    return %c0_i32, %c0_i32_0 : i32, i32
  }
  func.func @transform_2(%arg0: i32, %arg1: memref<2xi32, #tpu.memory_space<smem>>) -> (i32, i32) {
    %c0_i32 = arith.constant 0 : i32
    %c0_i32_0 = arith.constant 0 : i32
    %c0_i32_1 = arith.constant 0 : i32
    return %c0_i32, %c0_i32_0 : i32, i32
  }
  func.func @transform_3(%arg0: i32, %arg1: memref<2xi32, #tpu.memory_space<smem>>) -> (i32, i32) {
    %c0_i32 = arith.constant 0 : i32
    %c0_i32_0 = arith.constant 0 : i32
    %c0_i32_1 = arith.constant 0 : i32
    return %c0_i32, %c0_i32_0 : i32, i32
  }
  func.func @transform_4(%arg0: i32, %arg1: memref<2xi32, #tpu.memory_space<smem>>) -> (i32, i32) {
    %c0_i32 = arith.constant 0 : i32
    %c0_i32_0 = arith.constant 0 : i32
    %c0_i32_1 = arith.constant 0 : i32
    return %c0_i32, %c0_i32_0 : i32, i32
  }
  func.func @transform_5(%arg0: i32, %arg1: memref<2xi32, #tpu.memory_space<smem>>) -> (i32, i32) {
    %c0_i32 = arith.constant 0 : i32
    %c0_i32_0 = arith.constant 0 : i32
    %c0_i32_1 = arith.constant 0 : i32
    return %c0_i32, %c0_i32_0 : i32, i32
  }
}

</mosaic_0001>

<llo_original>
// kernel: tpu_custom_call.1
$region0: #{tpu_custom_call.1}
  #allocation0 [shape = 'u32[]', space=smem, size = 0x4, offset = 0x4, fixed_abs, tag = 'smem constant byte address 0x4 - core index']
  #allocation1 [shape = 'u32[144,128]{1,0:T(1,128)}', space=vmem, size = 0x12000, scoped, tag = 'internal scratch']
  #allocation2 [shape = 's32[1]{0}', space=sflag, size = 0x4, scoped, tag = 'scoped memory for tpu_custom_call.1']
  #allocation3 [shape = 'u8[512]{0}', space=smem, size = 0x200, scoped, tag = 'prefetched SMEM operand 0']
  %s0 = inlined_call_operand.vmem [shape: s32[2], index: 0, kind: input, shape index: {}]
  %s1 = inlined_call_operand.vmem [shape: f32[16,32], index: 1, kind: input, shape index: {}]
  %s2 = inlined_call_operand.vmem [shape: f32[32,192], index: 2, kind: input, shape index: {}]
  %s3 = inlined_call_operand.vmem [shape: f32[64,32], index: 3, kind: input, shape index: {}]
  %s4 = inlined_call_operand.vmem [shape: f32[6,192], index: 4, kind: input, shape index: {}]
  %s5 = inlined_call_operand.hbm [shape: f32[16,32], index: 5, kind: output, shape index: {0}]
  %s6 = inlined_call_operand.hbm [shape: f32[16,64], index: 6, kind: output, shape index: {1}]
  %7 = xla_tuple %s5, %s6
  %s8 = sld [smem:[#allocation0]]
  $region34: #{tpu_custom_call.1} parent=0
    _
  %s10 = ssub.s32 1, %s8
  %s11 = scalar_select 0, %s10, %s8
  %s12 = sshll.u32 %s0, 4
  %s13 = int_to_ptr.vmem [resolvable:$true] %s12
  %15 = dma.vmem_to_smem %s13, 16, [#allocation3], [#allocation2]
  %16 = dma.done [#allocation2], 16
  %17 = sfence
  $region1: #{tpu_custom_call.1} parent=0
    #allocation4 [shape = 'u8[8192]{0}', space=vmem, size = 0x2000, scoped, tag = 'output window, operand 0, single buffered']
    #allocation5 [shape = 's32[1]{0}', space=sflag, size = 0x4, scoped, tag = 'scoped memory for tpu_custom_call.1']
    #allocation6 [shape = 'u8[8192]{0}', space=vmem, size = 0x2000, scoped, tag = 'output window, operand 1, single buffered']
    #allocation7 [shape = 's32[1]{0}', space=sflag, size = 0x4, scoped, tag = 'scoped memory for tpu_custom_call.1']
    %18 = vsyncpa [#allocation5], 0
    %19 = vsyncpa [#allocation7], 0
    // Predicated region
    $region2: #{tpu_custom_call.1} parent=1 // pred_check
      _
    $region3: #{tpu_custom_call.1} parent=1 // pred_check_branch
      %21 = sbr.rel (0) target = $region5
    $region4: #{tpu_custom_call.1} parent=1 // pred_region
      _
    $region5: #{tpu_custom_call.1} parent=1 // pred_fallthru
      _
    // Predicated region
    $region6: #{tpu_custom_call.1} parent=1 // pred_check
      _
    $region7: #{tpu_custom_call.1} parent=1 // pred_check_branch
      %23 = sbr.rel (0) target = $region9
    $region8: #{tpu_custom_call.1} parent=1 // pred_region
      _
    $region9: #{tpu_custom_call.1} parent=1 // pred_fallthru
      _
    // Predicated region
    $region10: #{tpu_custom_call.1} parent=1 // pred_check
      _
    $region11: #{tpu_custom_call.1} parent=1 // pred_check_branch
      %25 = sbr.rel (0) target = $region13
    $region12: #{tpu_custom_call.1} parent=1 // pred_region
      _
    $region13: #{tpu_custom_call.1} parent=1 // pred_fallthru
      _
    // Predicated region
    $region14: #{tpu_custom_call.1} parent=1 // pred_check
      _
    $region15: #{tpu_custom_call.1} parent=1 // pred_check_branch
      %27 = sbr.rel (0) target = $region17
    $region16: #{tpu_custom_call.1} parent=1 // pred_region
      _
    $region17: #{tpu_custom_call.1} parent=1 // pred_fallthru
      _
    %v28 = vld [vmem:[%s1] sm:$0xff]
    %v29 = vld [vmem:[%s1 + $0x8] sm:$0xff]
    %v30 = vld [vmem:[%s2] sm:$0xff]
    %v31 = vld [vmem:[%s2 + $0x8] sm:$0xff]
    %v32 = vld [vmem:[%s2 + $0x10] sm:$0xff]
    %v33 = vld [vmem:[%s2 + $0x18] sm:$0xff]
    %v34 = vld [vmem:[%s2 + $0x20] sm:$0xff]
    %v35 = vld [vmem:[%s2 + $0x28] sm:$0xff]
    %v36 = vld [vmem:[%s2 + $0x30] sm:$0xff]
    %v37 = vld [vmem:[%s2 + $0x38] sm:$0xff]
    %v38 = vld [vmem:[%s4] sm:$0x3f]
    %v39 = vld [vmem:[%s4 + $0x8] sm:$0x3f]
    %vm40 = vcmask 261120
    %v41 = vsel %vm40, %v28, 0.0
    %42 = vadd.xlane.f32.xlu0 %v41
    %v43 = vpop.xlane.xlu0 %42
    %v44 = vsel %vm40, %v29, 0.0
    %45 = vadd.xlane.f32.xlu0 %v44
    %v46 = vpop.xlane.xlu0 %45
    %v47 = vrcp.pop 32.0
    %v48 = vmul.f32 %v43, %v47
    %v49 = vmul.f32 %v46, %v47
    %v50 = vsub.f32 %v28, %v48
    %v51 = vsub.f32 %v29, %v49
    %v52 = vmul.f32 %v50, %v50
    %v53 = vmul.f32 %v51, %v51
    %v54 = vsel %vm40, %v52, 0.0
    %55 = vadd.xlane.f32.xlu0 %v54
    %v56 = vpop.xlane.xlu0 %55
    %v57 = vsel %vm40, %v53, 0.0
    %58 = vadd.xlane.f32.xlu0 %v57
    %v59 = vpop.xlane.xlu0 %58
    %v60 = vmul.f32 %v56, %v47
    %v61 = vmul.f32 %v59, %v47
    %v62 = vadd.f32 %v60, 1e-05
    %v63 = vadd.f32 %v61, 1e-05
    %v64 = vrsqrt.pop %v62
    %v65 = vrsqrt.pop %v63
    %v66 = vmul.f32 %v50, %v64
    %v67 = vmul.f32 %v51, %v65
    %v68 = vlaneseq
    %v69 = vshrl.u32 %v68, 7
    %v70 = vsub.s32 1, %v69
    %v71 = vrot.slane %v38, %v70
    %v72 = vmul.f32 %v66, %v71
    %v73 = vmul.f32 %v67, %v71
    %v74 = vlaneseq
    %v75 = vshrl.u32 %v74, 7
    %v76 = vsub.s32 2, %v75
    %v77 = vrot.slane %v38, %v76
    %v78 = vadd.f32 %v72, %v77
    %v79 = vadd.f32 %v73, %v77
    %v80 = vlaneseq
    %v81 = vshrl.u32 %v80, 7
    %v82 = vsub.s32 0, %v81
    %v83 = vrot.slane %v38, %v82
    %v85 = vsel %vm40, %v78, 0
    %v88 = vsel %vm40, %v79, 0
    %90 = vmatprep.subr.mxu0 0.0
    %91 = vmatpush1.msra.mxu0 0.0
    %92 = vmatprep.subr.mxu0 0.0
    %93 = vmatpush1.msra.mxu0 0.0
    %94 = vmatprep.subr.mxu0 0.0
    %95 = vmatpush1.msra.mxu0 0.0
    %96 = vmatprep.subr.mxu0 0.0
    %97 = vmatpush1.msra.mxu0 0.0
    %98 = vmatprep.subr.mxu0 0.0
    %99 = vmatpush1.msra.mxu0 0.0
    %100 = vmatprep.subr.mxu0 0.0
    %101 = vmatpush1.msra.mxu0 0.0
    %102 = vmatprep.subr.mxu0 0.0
    %103 = vmatpush1.msra.mxu0 0.0
    %104 = vmatprep.subr.mxu0 0.0
    %105 = vmatpush1.msra.mxu0 0.0
    %106 = vmatprep.subr.mxu0 0.0
    %107 = vmatpush1.msra.mxu0 0.0
    %108 = vmatprep.subr.mxu0 0.0
    %109 = vmatpush1.msra.mxu0 0.0
    %110 = vmatprep.subr.mxu0 0.0
    %111 = vmatpush1.msra.mxu0 0.0
    %112 = vmatprep.subr.mxu0 0.0
    %113 = vmatpush1.msra.mxu0 0.0
    %114 = vmatprep.subr.mxu0 0.0
    %115 = vmatpush1.msra.mxu0 %v36
    %116 = vmatprep.subr.mxu0 0.0
    %117 = vmatpush1.msra.mxu0 %v34
    %118 = vmatprep.subr.mxu0 0.0
    %119 = vmatpush1.msra.mxu0 %v32
    %120 = vmatprep.subr.mxu0 0.0
    %121 = vmatpush1.msra.mxu0 %v30
    %122 = vmatprep.subr.mxu0 0.0
    %123 = vmatpush2.msra.mxu0 0.0
    %124 = vmatprep.subr.mxu0 0.0
    %125 = vmatpush2.msra.mxu0 0.0
    %126 = vmatprep.subr.mxu0 0.0
    %127 = vmatpush2.msra.mxu0 0.0
    %128 = vmatprep.subr.mxu0 0.0
    %129 = vmatpush2.msra.mxu0 0.0
    %130 = vmatprep.subr.mxu0 0.0
    %131 = vmatpush2.msra.mxu0 0.0
    %132 = vmatprep.subr.mxu0 0.0
    %133 = vmatpush2.msra.mxu0 0.0
    %134 = vmatprep.subr.mxu0 0.0
    %135 = vmatpush2.msra.mxu0 0.0
    %136 = vmatprep.subr.mxu0 0.0
    %137 = vmatpush2.msra.mxu0 0.0
    %138 = vmatprep.subr.mxu0 0.0
    %139 = vmatpush2.msra.mxu0 0.0
    %140 = vmatprep.subr.mxu0 0.0
    %141 = vmatpush2.msra.mxu0 0.0
    %142 = vmatprep.subr.mxu0 0.0
    %143 = vmatpush2.msra.mxu0 0.0
    %144 = vmatprep.subr.mxu0 0.0
    %145 = vmatpush2.msra.mxu0 0.0
    %146 = vmatprep.subr.mxu0 0.0
    %147 = vmatpush2.msra.mxu0 0.0
    %148 = vmatprep.subr.mxu0 0.0
    %149 = vmatpush2.msra.mxu0 0.0
    %150 = vmatprep.subr.mxu0 0.0
    %151 = vmatpush2.msra.mxu0 0.0
    %152 = vmatprep.subr.mxu0 0.0
    %153 = vmatpush2.msra.mxu0 0.0
    %154 = vmatprep.mubr.f32.mxu0 0.0
    %155 = vmatmul.mubr.f32.gmra.mxu0 %v85
    %v156 = vpop.f32.mrf.mxu0
    %v157 = vadd.f32 %v83, %v156
    %v158 = vpop.f32.mrf.mxu0
    %159 = vmatprep.mubr.f32.mxu0 0.0
    %160 = vmatmul.mubr.f32.gmra.mxu0 %v88
    %v161 = vpop.f32.mrf.mxu0
    %v162 = vadd.f32 %v83, %v161
    %v163 = vpop.f32.mrf.mxu0
    %164 = vdwg.mxu0
    %vm165 = vcmask 523264
    %166 = vst.msk [vmem:[#allocation6] sm:$0xff] %vm165, %v157
    %167 = vst.msk [vmem:[#allocation6 + $0x8] sm:$0xff] %vm165, %v162
    %170 = vrot.lane.b32.xlu0 %v157, 112
    %v171 = vpop.permute.xlu0 %170
    %172 = vrot.lane.b32.xlu0 %v162, 112
    %v173 = vpop.permute.xlu0 %172
    %176 = vrot.lane.b32.xlu0 %v157, 96
    %v177 = vpop.permute.xlu0 %176
    %178 = vrot.lane.b32.xlu0 %v162, 96
    %v179 = vpop.permute.xlu0 %178
    %182 = vrot.lane.b32.xlu0 %v157, 80
    %v183 = vpop.permute.xlu0 %182
    %184 = vrot.lane.b32.xlu0 %v162, 80
    %v185 = vpop.permute.xlu0 %184
    %v188 = vcombine.low %v157, %v177
    %v189 = vcombine.high %v157, %v177
    %v191 = vunpack.c.l.s4 1983009808
    %v192 = vunpack.c.0.s8 %v191
    %v193 = vlaneseq
    %v194 = vshrl.u32 %v193, 7
    %v195 = vsub.s32 %v192, %v194
    %v196 = vrot.slane %v188, %v195
    %v198 = vunpack.c.l.s4 1983009808
    %v199 = vunpack.c.0.s8 %v198
    %v200 = vlaneseq
    %v201 = vshrl.u32 %v200, 7
    %v202 = vsub.s32 %v199, %v201
    %v203 = vrot.slane %v189, %v202
    %v204 = vcombine.low %v171, %v183
    %v205 = vcombine.high %v171, %v183
    %v207 = vunpack.c.l.s4 1983009808
    %v208 = vunpack.c.0.s8 %v207
    %v209 = vlaneseq
    %v210 = vshrl.u32 %v209, 7
    %v211 = vsub.s32 %v208, %v210
    %v212 = vrot.slane %v204, %v211
    %v214 = vunpack.c.l.s4 1983009808
    %v215 = vunpack.c.0.s8 %v214
    %v216 = vlaneseq
    %v217 = vshrl.u32 %v216, 7
    %v218 = vsub.s32 %v215, %v217
    %v219 = vrot.slane %v205, %v218
    %v220 = vcombine.low %v196, %v212
    %v221 = vcombine.high %v196, %v212
    %v223 = vunpack.c.l.s4 1934713408
    %v224 = vunpack.c.0.s8 %v223
    %v225 = vlaneseq
    %v226 = vshrl.u32 %v225, 7
    %v227 = vsub.s32 %v224, %v226
    %v228 = vrot.slane %v220, %v227
    %v230 = vunpack.c.l.s4 1934713408
    %v231 = vunpack.c.0.s8 %v230
    %v232 = vlaneseq
    %v233 = vshrl.u32 %v232, 7
    %v234 = vsub.s32 %v231, %v233
    %v235 = vrot.slane %v221, %v234
    %v236 = vcombine.low %v203, %v219
    %v237 = vcombine.high %v203, %v219
    %v239 = vunpack.c.l.s4 1934713408
    %v240 = vunpack.c.0.s8 %v239
    %v241 = vlaneseq
    %v242 = vshrl.u32 %v241, 7
    %v243 = vsub.s32 %v240, %v242
    %v244 = vrot.slane %v236, %v243
    %v246 = vunpack.c.l.s4 1934713408
    %v247 = vunpack.c.0.s8 %v246
    %v248 = vlaneseq
    %v249 = vshrl.u32 %v248, 7
    %v250 = vsub.s32 %v247, %v249
    %v251 = vrot.slane %v237, %v250
    %v252 = vcombine.high %v228, 0.0
    %v253 = vcombine.high %v235, 0.0
    %v254 = vcombine.high %v244, 0.0
    %v255 = vcombine.high %v251, 0.0
    %v256 = vcombine.low %v162, %v179
    %v257 = vcombine.high %v162, %v179
    %v259 = vunpack.c.l.s4 1983009808
    %v260 = vunpack.c.0.s8 %v259
    %v261 = vlaneseq
    %v262 = vshrl.u32 %v261, 7
    %v263 = vsub.s32 %v260, %v262
    %v264 = vrot.slane %v256, %v263
    %v266 = vunpack.c.l.s4 1983009808
    %v267 = vunpack.c.0.s8 %v266
    %v268 = vlaneseq
    %v269 = vshrl.u32 %v268, 7
    %v270 = vsub.s32 %v267, %v269
    %v271 = vrot.slane %v257, %v270
    %v272 = vcombine.low %v173, %v185
    %v273 = vcombine.high %v173, %v185
    %v275 = vunpack.c.l.s4 1983009808
    %v276 = vunpack.c.0.s8 %v275
    %v277 = vlaneseq
    %v278 = vshrl.u32 %v277, 7
    %v279 = vsub.s32 %v276, %v278
    %v280 = vrot.slane %v272, %v279
    %v282 = vunpack.c.l.s4 1983009808
    %v283 = vunpack.c.0.s8 %v282
    %v284 = vlaneseq
    %v285 = vshrl.u32 %v284, 7
    %v286 = vsub.s32 %v283, %v285
    %v287 = vrot.slane %v273, %v286
    %v288 = vcombine.low %v264, %v280
    %v289 = vcombine.high %v264, %v280
    %v291 = vunpack.c.l.s4 1934713408
    %v292 = vunpack.c.0.s8 %v291
    %v293 = vlaneseq
    %v294 = vshrl.u32 %v293, 7
    %v295 = vsub.s32 %v292, %v294
    %v296 = vrot.slane %v288, %v295
    %v298 = vunpack.c.l.s4 1934713408
    %v299 = vunpack.c.0.s8 %v298
    %v300 = vlaneseq
    %v301 = vshrl.u32 %v300, 7
    %v302 = vsub.s32 %v299, %v301
    %v303 = vrot.slane %v289, %v302
    %v304 = vcombine.low %v271, %v287
    %v305 = vcombine.high %v271, %v287
    %v307 = vunpack.c.l.s4 1934713408
    %v308 = vunpack.c.0.s8 %v307
    %v309 = vlaneseq
    %v310 = vshrl.u32 %v309, 7
    %v311 = vsub.s32 %v308, %v310
    %v312 = vrot.slane %v304, %v311
    %v314 = vunpack.c.l.s4 1934713408
    %v315 = vunpack.c.0.s8 %v314
    %v316 = vlaneseq
    %v317 = vshrl.u32 %v316, 7
    %v318 = vsub.s32 %v315, %v317
    %v319 = vrot.slane %v305, %v318
    %v320 = vcombine.high %v296, 0.0
    %v321 = vcombine.high %v303, 0.0
    %v322 = vcombine.high %v312, 0.0
    %v323 = vcombine.high %v319, 0.0
    %v324 = vcombine.low %v228, %v235
    %v326 = vunpack.c.l.s4 1983009808
    %v327 = vunpack.c.0.s8 %v326
    %v328 = vlaneseq
    %v329 = vshrl.u32 %v328, 7
    %v330 = vsub.s32 %v327, %v329
    %v331 = vrot.slane %v324, %v330
    %v332 = vcombine.low %v252, %v253
    %v334 = vunpack.c.l.s4 1983009808
    %v335 = vunpack.c.0.s8 %v334
    %v336 = vlaneseq
    %v337 = vshrl.u32 %v336, 7
    %v338 = vsub.s32 %v335, %v337
    %v339 = vrot.slane %v332, %v338
    %v340 = vcombine.low %v244, %v251
    %v342 = vunpack.c.l.s4 1983009808
    %v343 = vunpack.c.0.s8 %v342
    %v344 = vlaneseq
    %v345 = vshrl.u32 %v344, 7
    %v346 = vsub.s32 %v343, %v345
    %v347 = vrot.slane %v340, %v346
    %v348 = vcombine.low %v254, %v255
    %v350 = vunpack.c.l.s4 1983009808
    %v351 = vunpack.c.0.s8 %v350
    %v352 = vlaneseq
    %v353 = vshrl.u32 %v352, 7
    %v354 = vsub.s32 %v351, %v353
    %v355 = vrot.slane %v348, %v354
    %v356 = vcombine.low %v331, %v339
    %v357 = vcombine.high %v331, %v339
    %v359 = vunpack.c.l.s4 1934713408
    %v360 = vunpack.c.0.s8 %v359
    %v361 = vlaneseq
    %v362 = vshrl.u32 %v361, 7
    %v363 = vsub.s32 %v360, %v362
    %v364 = vrot.slane %v356, %v363
    %v366 = vunpack.c.l.s4 1934713408
    %v367 = vunpack.c.0.s8 %v366
    %v368 = vlaneseq
    %v369 = vshrl.u32 %v368, 7
    %v370 = vsub.s32 %v367, %v369
    %v371 = vrot.slane %v357, %v370
    %v372 = vcombine.low %v347, %v355
    %v373 = vcombine.high %v347, %v355
    %v375 = vunpack.c.l.s4 1934713408
    %v376 = vunpack.c.0.s8 %v375
    %v377 = vlaneseq
    %v378 = vshrl.u32 %v377, 7
    %v379 = vsub.s32 %v376, %v378
    %v380 = vrot.slane %v372, %v379
    %v382 = vunpack.c.l.s4 1934713408
    %v383 = vunpack.c.0.s8 %v382
    %v384 = vlaneseq
    %v385 = vshrl.u32 %v384, 7
    %v386 = vsub.s32 %v383, %v385
    %v387 = vrot.slane %v373, %v386
    %v388 = vcombine.low %v364, %v380
    %v389 = vcombine.high %v364, %v380
    %v390 = vcombine.low %v371, %v387
    %v391 = vcombine.high %v371, %v387
    %v392 = vcombine.low %v296, %v303
    %v394 = vunpack.c.l.s4 1983009808
    %v395 = vunpack.c.0.s8 %v394
    %v396 = vlaneseq
    %v397 = vshrl.u32 %v396, 7
    %v398 = vsub.s32 %v395, %v397
    %v399 = vrot.slane %v392, %v398
    %v400 = vcombine.low %v320, %v321
    %v402 = vunpack.c.l.s4 1983009808
    %v403 = vunpack.c.0.s8 %v402
    %v404 = vlaneseq
    %v405 = vshrl.u32 %v404, 7
    %v406 = vsub.s32 %v403, %v405
    %v407 = vrot.slane %v400, %v406
    %v408 = vcombine.low %v312, %v319
    %v410 = vunpack.c.l.s4 1983009808
    %v411 = vunpack.c.0.s8 %v410
    %v412 = vlaneseq
    %v413 = vshrl.u32 %v412, 7
    %v414 = vsub.s32 %v411, %v413
    %v415 = vrot.slane %v408, %v414
    %v416 = vcombine.low %v322, %v323
    %v418 = vunpack.c.l.s4 1983009808
    %v419 = vunpack.c.0.s8 %v418
    %v420 = vlaneseq
    %v421 = vshrl.u32 %v420, 7
    %v422 = vsub.s32 %v419, %v421
    %v423 = vrot.slane %v416, %v422
    %v424 = vcombine.low %v399, %v407
    %v425 = vcombine.high %v399, %v407
    %v427 = vunpack.c.l.s4 1934713408
    %v428 = vunpack.c.0.s8 %v427
    %v429 = vlaneseq
    %v430 = vshrl.u32 %v429, 7
    %v431 = vsub.s32 %v428, %v430
    %v432 = vrot.slane %v424, %v431
    %v434 = vunpack.c.l.s4 1934713408
    %v435 = vunpack.c.0.s8 %v434
    %v436 = vlaneseq
    %v437 = vshrl.u32 %v436, 7
    %v438 = vsub.s32 %v435, %v437
    %v439 = vrot.slane %v425, %v438
    %v440 = vcombine.low %v415, %v423
    %v441 = vcombine.high %v415, %v423
    %v443 = vunpack.c.l.s4 1934713408
    %v444 = vunpack.c.0.s8 %v443
    %v445 = vlaneseq
    %v446 = vshrl.u32 %v445, 7
    %v447 = vsub.s32 %v444, %v446
    %v448 = vrot.slane %v440, %v447
    %v450 = vunpack.c.l.s4 1934713408
    %v451 = vunpack.c.0.s8 %v450
    %v452 = vlaneseq
    %v453 = vshrl.u32 %v452, 7
    %v454 = vsub.s32 %v451, %v453
    %v455 = vrot.slane %v441, %v454
    %v456 = vcombine.low %v432, %v448
    %v457 = vcombine.high %v432, %v448
    %v458 = vcombine.low %v439, %v455
    %v459 = vcombine.high %v439, %v455
    %460 = vrot.lane.b32.xlu0 %v157, 120
    %v461 = vpop.permute.xlu0 %460
    %462 = vrot.lane.b32.xlu0 %v162, 120
    %v463 = vpop.permute.xlu0 %462
    %464 = vrot.lane.b32.xlu0 %v157, 104
    %v465 = vpop.permute.xlu0 %464
    %466 = vrot.lane.b32.xlu0 %v162, 104
    %v467 = vpop.permute.xlu0 %466
    %468 = vrot.lane.b32.xlu0 %v157, 64
    %v469 = vpop.permute.xlu0 %468
    %470 = vrot.lane.b32.xlu0 %v162, 64
    %v471 = vpop.permute.xlu0 %470
    %472 = vrot.lane.b32.xlu0 %v461, 64
    %v473 = vpop.permute.xlu0 %472
    %474 = vrot.lane.b32.xlu0 %v463, 64
    %v475 = vpop.permute.xlu0 %474
    %476 = vrot.lane.b32.xlu0 %v171, 64
    %v477 = vpop.permute.xlu0 %476
    %478 = vrot.lane.b32.xlu0 %v173, 64
    %v479 = vpop.permute.xlu0 %478
    %480 = vrot.lane.b32.xlu0 %v465, 64
    %v481 = vpop.permute.xlu0 %480
    %482 = vrot.lane.b32.xlu0 %v467, 64
    %v483 = vpop.permute.xlu0 %482
    %v492 = vcombine.low %v469, %v477
    %v493 = vcombine.high %v469, %v477
    %v495 = vunpack.c.l.s4 1983009808
    %v496 = vunpack.c.0.s8 %v495
    %v497 = vlaneseq
    %v498 = vshrl.u32 %v497, 7
    %v499 = vsub.s32 %v496, %v498
    %v500 = vrot.slane %v492, %v499
    %v502 = vunpack.c.l.s4 1983009808
    %v503 = vunpack.c.0.s8 %v502
    %v504 = vlaneseq
    %v505 = vshrl.u32 %v504, 7
    %v506 = vsub.s32 %v503, %v505
    %v507 = vrot.slane %v493, %v506
    %v508 = vcombine.low %v473, %v481
    %v509 = vcombine.high %v473, %v481
    %v511 = vunpack.c.l.s4 1983009808
    %v512 = vunpack.c.0.s8 %v511
    %v513 = vlaneseq
    %v514 = vshrl.u32 %v513, 7
    %v515 = vsub.s32 %v512, %v514
    %v516 = vrot.slane %v508, %v515
    %v518 = vunpack.c.l.s4 1983009808
    %v519 = vunpack.c.0.s8 %v518
    %v520 = vlaneseq
    %v521 = vshrl.u32 %v520, 7
    %v522 = vsub.s32 %v519, %v521
    %v523 = vrot.slane %v509, %v522
    %v524 = vcombine.low %v500, %v516
    %v525 = vcombine.high %v500, %v516
    %v527 = vunpack.c.l.s4 1934713408
    %v528 = vunpack.c.0.s8 %v527
    %v529 = vlaneseq
    %v530 = vshrl.u32 %v529, 7
    %v531 = vsub.s32 %v528, %v530
    %v532 = vrot.slane %v524, %v531
    %v534 = vunpack.c.l.s4 1934713408
    %v535 = vunpack.c.0.s8 %v534
    %v536 = vlaneseq
    %v537 = vshrl.u32 %v536, 7
    %v538 = vsub.s32 %v535, %v537
    %v539 = vrot.slane %v525, %v538
    %v540 = vcombine.low %v507, %v523
    %v541 = vcombine.high %v507, %v523
    %v543 = vunpack.c.l.s4 1934713408
    %v544 = vunpack.c.0.s8 %v543
    %v545 = vlaneseq
    %v546 = vshrl.u32 %v545, 7
    %v547 = vsub.s32 %v544, %v546
    %v548 = vrot.slane %v540, %v547
    %v550 = vunpack.c.l.s4 1934713408
    %v551 = vunpack.c.0.s8 %v550
    %v552 = vlaneseq
    %v553 = vshrl.u32 %v552, 7
    %v554 = vsub.s32 %v551, %v553
    %v555 = vrot.slane %v541, %v554
    %v556 = vcombine.high %v532, 0.0
    %v557 = vcombine.high %v539, 0.0
    %v558 = vcombine.high %v548, 0.0
    %v559 = vcombine.high %v555, 0.0
    %v560 = vcombine.low %v471, %v479
    %v561 = vcombine.high %v471, %v479
    %v563 = vunpack.c.l.s4 1983009808
    %v564 = vunpack.c.0.s8 %v563
    %v565 = vlaneseq
    %v566 = vshrl.u32 %v565, 7
    %v567 = vsub.s32 %v564, %v566
    %v568 = vrot.slane %v560, %v567
    %v570 = vunpack.c.l.s4 1983009808
    %v571 = vunpack.c.0.s8 %v570
    %v572 = vlaneseq
    %v573 = vshrl.u32 %v572, 7
    %v574 = vsub.s32 %v571, %v573
    %v575 = vrot.slane %v561, %v574
    %v576 = vcombine.low %v475, %v483
    %v577 = vcombine.high %v475, %v483
    %v579 = vunpack.c.l.s4 1983009808
    %v580 = vunpack.c.0.s8 %v579
    %v581 = vlaneseq
    %v582 = vshrl.u32 %v581, 7
    %v583 = vsub.s32 %v580, %v582
    %v584 = vrot.slane %v576, %v583
    %v586 = vunpack.c.l.s4 1983009808
    %v587 = vunpack.c.0.s8 %v586
    %v588 = vlaneseq
    %v589 = vshrl.u32 %v588, 7
    %v590 = vsub.s32 %v587, %v589
    %v591 = vrot.slane %v577, %v590
    %v592 = vcombine.low %v568, %v584
    %v593 = vcombine.high %v568, %v584
    %v595 = vunpack.c.l.s4 1934713408
    %v596 = vunpack.c.0.s8 %v595
    %v597 = vlaneseq
    %v598 = vshrl.u32 %v597, 7
    %v599 = vsub.s32 %v596, %v598
    %v600 = vrot.slane %v592, %v599
    %v602 = vunpack.c.l.s4 1934713408
    %v603 = vunpack.c.0.s8 %v602
    %v604 = vlaneseq
    %v605 = vshrl.u32 %v604, 7
    %v606 = vsub.s32 %v603, %v605
    %v607 = vrot.slane %v593, %v606
    %v608 = vcombine.low %v575, %v591
    %v609 = vcombine.high %v575, %v591
    %v611 = vunpack.c.l.s4 1934713408
    %v612 = vunpack.c.0.s8 %v611
    %v613 = vlaneseq
    %v614 = vshrl.u32 %v613, 7
    %v615 = vsub.s32 %v612, %v614
    %v616 = vrot.slane %v608, %v615
    %v618 = vunpack.c.l.s4 1934713408
    %v619 = vunpack.c.0.s8 %v618
    %v620 = vlaneseq
    %v621 = vshrl.u32 %v620, 7
    %v622 = vsub.s32 %v619, %v621
    %v623 = vrot.slane %v609, %v622
    %v624 = vcombine.high %v600, 0.0
    %v625 = vcombine.high %v607, 0.0
    %v626 = vcombine.high %v616, 0.0
    %v627 = vcombine.high %v623, 0.0
    %v628 = vcombine.low %v532, %v539
    %v630 = vunpack.c.l.s4 1983009808
    %v631 = vunpack.c.0.s8 %v630
    %v632 = vlaneseq
    %v633 = vshrl.u32 %v632, 7
    %v634 = vsub.s32 %v631, %v633
    %v635 = vrot.slane %v628, %v634
    %v636 = vcombine.low %v556, %v557
    %v638 = vunpack.c.l.s4 1983009808
    %v639 = vunpack.c.0.s8 %v638
    %v640 = vlaneseq
    %v641 = vshrl.u32 %v640, 7
    %v642 = vsub.s32 %v639, %v641
    %v643 = vrot.slane %v636, %v642
    %v644 = vcombine.low %v548, %v555
    %v646 = vunpack.c.l.s4 1983009808
    %v647 = vunpack.c.0.s8 %v646
    %v648 = vlaneseq
    %v649 = vshrl.u32 %v648, 7
    %v650 = vsub.s32 %v647, %v649
    %v651 = vrot.slane %v644, %v650
    %v652 = vcombine.low %v558, %v559
    %v654 = vunpack.c.l.s4 1983009808
    %v655 = vunpack.c.0.s8 %v654
    %v656 = vlaneseq
    %v657 = vshrl.u32 %v656, 7
    %v658 = vsub.s32 %v655, %v657
    %v659 = vrot.slane %v652, %v658
    %v660 = vcombine.low %v635, %v643
    %v661 = vcombine.high %v635, %v643
    %v663 = vunpack.c.l.s4 1934713408
    %v664 = vunpack.c.0.s8 %v663
    %v665 = vlaneseq
    %v666 = vshrl.u32 %v665, 7
    %v667 = vsub.s32 %v664, %v666
    %v668 = vrot.slane %v660, %v667
    %v670 = vunpack.c.l.s4 1934713408
    %v671 = vunpack.c.0.s8 %v670
    %v672 = vlaneseq
    %v673 = vshrl.u32 %v672, 7
    %v674 = vsub.s32 %v671, %v673
    %v675 = vrot.slane %v661, %v674
    %v676 = vcombine.low %v651, %v659
    %v677 = vcombine.high %v651, %v659
    %v679 = vunpack.c.l.s4 1934713408
    %v680 = vunpack.c.0.s8 %v679
    %v681 = vlaneseq
    %v682 = vshrl.u32 %v681, 7
    %v683 = vsub.s32 %v680, %v682
    %v684 = vrot.slane %v676, %v683
    %v686 = vunpack.c.l.s4 1934713408
    %v687 = vunpack.c.0.s8 %v686
    %v688 = vlaneseq
    %v689 = vshrl.u32 %v688, 7
    %v690 = vsub.s32 %v687, %v689
    %v691 = vrot.slane %v677, %v690
    %v692 = vcombine.low %v668, %v684
    %v693 = vcombine.high %v668, %v684
    %v694 = vcombine.low %v675, %v691
    %v695 = vcombine.high %v675, %v691
    %v696 = vcombine.low %v600, %v607
    %v698 = vunpack.c.l.s4 1983009808
    %v699 = vunpack.c.0.s8 %v698
    %v700 = vlaneseq
    %v701 = vshrl.u32 %v700, 7
    %v702 = vsub.s32 %v699, %v701
    %v703 = vrot.slane %v696, %v702
    %v704 = vcombine.low %v624, %v625
    %v706 = vunpack.c.l.s4 1983009808
    %v707 = vunpack.c.0.s8 %v706
    %v708 = vlaneseq
    %v709 = vshrl.u32 %v708, 7
    %v710 = vsub.s32 %v707, %v709
    %v711 = vrot.slane %v704, %v710
    %v712 = vcombine.low %v616, %v623
    %v714 = vunpack.c.l.s4 1983009808
    %v715 = vunpack.c.0.s8 %v714
    %v716 = vlaneseq
    %v717 = vshrl.u32 %v716, 7
    %v718 = vsub.s32 %v715, %v717
    %v719 = vrot.slane %v712, %v718
    %v720 = vcombine.low %v626, %v627
    %v722 = vunpack.c.l.s4 1983009808
    %v723 = vunpack.c.0.s8 %v722
    %v724 = vlaneseq
    %v725 = vshrl.u32 %v724, 7
    %v726 = vsub.s32 %v723, %v725
    %v727 = vrot.slane %v720, %v726
    %v728 = vcombine.low %v703, %v711
    %v729 = vcombine.high %v703, %v711
    %v731 = vunpack.c.l.s4 1934713408
    %v732 = vunpack.c.0.s8 %v731
    %v733 = vlaneseq
    %v734 = vshrl.u32 %v733, 7
    %v735 = vsub.s32 %v732, %v734
    %v736 = vrot.slane %v728, %v735
    %v738 = vunpack.c.l.s4 1934713408
    %v739 = vunpack.c.0.s8 %v738
    %v740 = vlaneseq
    %v741 = vshrl.u32 %v740, 7
    %v742 = vsub.s32 %v739, %v741
    %v743 = vrot.slane %v729, %v742
    %v744 = vcombine.low %v719, %v727
    %v745 = vcombine.high %v719, %v727
    %v747 = vunpack.c.l.s4 1934713408
    %v748 = vunpack.c.0.s8 %v747
    %v749 = vlaneseq
    %v750 = vshrl.u32 %v749, 7
    %v751 = vsub.s32 %v748, %v750
    %v752 = vrot.slane %v744, %v751
    %v754 = vunpack.c.l.s4 1934713408
    %v755 = vunpack.c.0.s8 %v754
    %v756 = vlaneseq
    %v757 = vshrl.u32 %v756, 7
    %v758 = vsub.s32 %v755, %v757
    %v759 = vrot.slane %v745, %v758
    %v760 = vcombine.low %v736, %v752
    %v761 = vcombine.high %v736, %v752
    %v762 = vcombine.low %v743, %v759
    %v763 = vcombine.high %v743, %v759
    %v764 = vlaneseq
    %v765 = vshrl.u32 %v764, 7
    %v766 = vlaneseq
    %v767 = vand.u32 %v766, 127
    %s768 = sld [smem:[#allocation3]]
    %v769 = vstv %s768
    %vm770 = vcmp.lt.s32.totalorder %v765, %v769
    %vm771 = vcmp.lt.s32.totalorder %v767, %v769
    %vm772 = vmand %vm770, %vm771
    %v773 = vsel %vm772, 0.0, -1e+09
    %v774 = vsel %vm770, 1.0, 0.0
    %s775 = sld [smem:[#allocation3 + $0x1]]
    %v776 = vstv %s775
    %vm777 = vcmp.lt.s32.totalorder %v765, %v776
    %vm778 = vcmp.lt.s32.totalorder %v767, %v776
    %vm779 = vmand %vm777, %vm778
    %v780 = vsel %vm779, 0.0, -1e+09
    %v781 = vsel %vm777, 1.0, 0.0
    %vm782 = vcmask 64512
    %v784 = vsel %vm782, %v692, 0
    %v787 = vsel %vm782, %v388, 0
    %789 = vmatprep.subr.mxu0 0.0
    %790 = vmatpush1.xpose.msra.mxu0 0.0
    %791 = vmatprep.subr.mxu0 0.0
    %792 = vmatpush1.xpose.msra.mxu0 0.0
    %793 = vmatprep.subr.mxu0 0.0
    %794 = vmatpush1.xpose.msra.mxu0 0.0
    %795 = vmatprep.subr.mxu0 0.0
    %796 = vmatpush1.xpose.msra.mxu0 0.0
    %797 = vmatprep.subr.mxu0 0.0
    %798 = vmatpush1.xpose.msra.mxu0 0.0
    %799 = vmatprep.subr.mxu0 0.0
    %800 = vmatpush1.xpose.msra.mxu0 0.0
    %801 = vmatprep.subr.mxu0 0.0
    %802 = vmatpush1.xpose.msra.mxu0 0.0
    %803 = vmatprep.subr.mxu0 0.0
    %804 = vmatpush1.xpose.msra.mxu0 0.0
    %805 = vmatprep.subr.mxu0 0.0
    %806 = vmatpush1.xpose.msra.mxu0 0.0
    %807 = vmatprep.subr.mxu0 0.0
    %808 = vmatpush1.xpose.msra.mxu0 0.0
    %809 = vmatprep.subr.mxu0 0.0
    %810 = vmatpush1.xpose.msra.mxu0 0.0
    %811 = vmatprep.subr.mxu0 0.0
    %812 = vmatpush1.xpose.msra.mxu0 0.0
    %813 = vmatprep.subr.mxu0 0.0
    %814 = vmatpush1.xpose.msra.mxu0 0.0
    %815 = vmatprep.subr.mxu0 0.0
    %816 = vmatpush1.xpose.msra.mxu0 0.0
    %817 = vmatprep.subr.mxu0 0.0
    %818 = vmatpush1.xpose.msra.mxu0 0.0
    %819 = vmatprep.subr.mxu0 0.0
    %820 = vmatpush1.xpose.msra.mxu0 %v787
    %821 = vmatprep.subr.mxu0 0.0
    %822 = vmatpush2.xpose.msra.mxu0 0.0
    %823 = vmatprep.subr.mxu0 0.0
    %824 = vmatpush2.xpose.msra.mxu0 0.0
    %825 = vmatprep.subr.mxu0 0.0
    %826 = vmatpush2.xpose.msra.mxu0 0.0
    %827 = vmatprep.subr.mxu0 0.0
    %828 = vmatpush2.xpose.msra.mxu0 0.0
    %829 = vmatprep.subr.mxu0 0.0
    %830 = vmatpush2.xpose.msra.mxu0 0.0
    %831 = vmatprep.subr.mxu0 0.0
    %832 = vmatpush2.xpose.msra.mxu0 0.0
    %833 = vmatprep.subr.mxu0 0.0
    %834 = vmatpush2.xpose.msra.mxu0 0.0
    %835 = vmatprep.subr.mxu0 0.0
    %836 = vmatpush2.xpose.msra.mxu0 0.0
    %837 = vmatprep.subr.mxu0 0.0
    %838 = vmatpush2.xpose.msra.mxu0 0.0
    %839 = vmatprep.subr.mxu0 0.0
    %840 = vmatpush2.xpose.msra.mxu0 0.0
    %841 = vmatprep.subr.mxu0 0.0
    %842 = vmatpush2.xpose.msra.mxu0 0.0
    %843 = vmatprep.subr.mxu0 0.0
    %844 = vmatpush2.xpose.msra.mxu0 0.0
    %845 = vmatprep.subr.mxu0 0.0
    %846 = vmatpush2.xpose.msra.mxu0 0.0
    %847 = vmatprep.subr.mxu0 0.0
    %848 = vmatpush2.xpose.msra.mxu0 0.0
    %849 = vmatprep.subr.mxu0 0.0
    %850 = vmatpush2.xpose.msra.mxu0 0.0
    %851 = vmatprep.subr.mxu0 0.0
    %852 = vmatpush2.xpose.msra.mxu0 0.0
    %853 = vmatprep.mubr.f32.mxu0 0.0
    %854 = vmatmul.mubr.f32.gmra.mxu0 %v784
    %v855 = vpop.f32.mrf.mxu0
    %v856 = vadd.f32 0.0, %v855
    %v857 = vpop.f32.mrf.mxu0
    %858 = vdwg.mxu0
    %v860 = vsel %vm782, %v693, 0
    %v863 = vsel %vm782, %v389, 0
    %865 = vmatprep.subr.mxu0 0.0
    %866 = vmatpush1.xpose.msra.mxu0 0.0
    %867 = vmatprep.subr.mxu0 0.0
    %868 = vmatpush1.xpose.msra.mxu0 0.0
    %869 = vmatprep.subr.mxu0 0.0
    %870 = vmatpush1.xpose.msra.mxu0 0.0
    %871 = vmatprep.subr.mxu0 0.0
    %872 = vmatpush1.xpose.msra.mxu0 0.0
    %873 = vmatprep.subr.mxu0 0.0
    %874 = vmatpush1.xpose.msra.mxu0 0.0
    %875 = vmatprep.subr.mxu0 0.0
    %876 = vmatpush1.xpose.msra.mxu0 0.0
    %877 = vmatprep.subr.mxu0 0.0
    %878 = vmatpush1.xpose.msra.mxu0 0.0
    %879 = vmatprep.subr.mxu0 0.0
    %880 = vmatpush1.xpose.msra.mxu0 0.0
    %881 = vmatprep.subr.mxu0 0.0
    %882 = vmatpush1.xpose.msra.mxu0 0.0
    %883 = vmatprep.subr.mxu0 0.0
    %884 = vmatpush1.xpose.msra.mxu0 0.0
    %885 = vmatprep.subr.mxu0 0.0
    %886 = vmatpush1.xpose.msra.mxu0 0.0
    %887 = vmatprep.subr.mxu0 0.0
    %888 = vmatpush1.xpose.msra.mxu0 0.0
    %889 = vmatprep.subr.mxu0 0.0
    %890 = vmatpush1.xpose.msra.mxu0 0.0
    %891 = vmatprep.subr.mxu0 0.0
    %892 = vmatpush1.xpose.msra.mxu0 0.0
    %893 = vmatprep.subr.mxu0 0.0
    %894 = vmatpush1.xpose.msra.mxu0 0.0
    %895 = vmatprep.subr.mxu0 0.0
    %896 = vmatpush1.xpose.msra.mxu0 %v863
    %897 = vmatprep.subr.mxu0 0.0
    %898 = vmatpush2.xpose.msra.mxu0 0.0
    %899 = vmatprep.subr.mxu0 0.0
    %900 = vmatpush2.xpose.msra.mxu0 0.0
    %901 = vmatprep.subr.mxu0 0.0
    %902 = vmatpush2.xpose.msra.mxu0 0.0
    %903 = vmatprep.subr.mxu0 0.0
    %904 = vmatpush2.xpose.msra.mxu0 0.0
    %905 = vmatprep.subr.mxu0 0.0
    %906 = vmatpush2.xpose.msra.mxu0 0.0
    %907 = vmatprep.subr.mxu0 0.0
    %908 = vmatpush2.xpose.msra.mxu0 0.0
    %909 = vmatprep.subr.mxu0 0.0
    %910 = vmatpush2.xpose.msra.mxu0 0.0
    %911 = vmatprep.subr.mxu0 0.0
    %912 = vmatpush2.xpose.msra.mxu0 0.0
    %913 = vmatprep.subr.mxu0 0.0
    %914 = vmatpush2.xpose.msra.mxu0 0.0
    %915 = vmatprep.subr.mxu0 0.0
    %916 = vmatpush2.xpose.msra.mxu0 0.0
    %917 = vmatprep.subr.mxu0 0.0
    %918 = vmatpush2.xpose.msra.mxu0 0.0
    %919 = vmatprep.subr.mxu0 0.0
    %920 = vmatpush2.xpose.msra.mxu0 0.0
    %921 = vmatprep.subr.mxu0 0.0
    %922 = vmatpush2.xpose.msra.mxu0 0.0
    %923 = vmatprep.subr.mxu0 0.0
    %924 = vmatpush2.xpose.msra.mxu0 0.0
    %925 = vmatprep.subr.mxu0 0.0
    %926 = vmatpush2.xpose.msra.mxu0 0.0
    %927 = vmatprep.subr.mxu0 0.0
    %928 = vmatpush2.xpose.msra.mxu0 0.0
    %929 = vmatprep.mubr.f32.mxu0 0.0
    %930 = vmatmul.mubr.f32.gmra.mxu0 %v860
    %v931 = vpop.f32.mrf.mxu0
    %v932 = vadd.f32 0.0, %v931
    %v933 = vpop.f32.mrf.mxu0
    %934 = vdwg.mxu0
    %v936 = vsel %vm782, %v694, 0
    %v939 = vsel %vm782, %v390, 0
    %941 = vmatprep.subr.mxu0 0.0
    %942 = vmatpush1.xpose.msra.mxu0 0.0
    %943 = vmatprep.subr.mxu0 0.0
    %944 = vmatpush1.xpose.msra.mxu0 0.0
    %945 = vmatprep.subr.mxu0 0.0
    %946 = vmatpush1.xpose.msra.mxu0 0.0
    %947 = vmatprep.subr.mxu0 0.0
    %948 = vmatpush1.xpose.msra.mxu0 0.0
    %949 = vmatprep.subr.mxu0 0.0
    %950 = vmatpush1.xpose.msra.mxu0 0.0
    %951 = vmatprep.subr.mxu0 0.0
    %952 = vmatpush1.xpose.msra.mxu0 0.0
    %953 = vmatprep.subr.mxu0 0.0
    %954 = vmatpush1.xpose.msra.mxu0 0.0
    %955 = vmatprep.subr.mxu0 0.0
    %956 = vmatpush1.xpose.msra.mxu0 0.0
    %957 = vmatprep.subr.mxu0 0.0
    %958 = vmatpush1.xpose.msra.mxu0 0.0
    %959 = vmatprep.subr.mxu0 0.0
    %960 = vmatpush1.xpose.msra.mxu0 0.0
    %961 = vmatprep.subr.mxu0 0.0
    %962 = vmatpush1.xpose.msra.mxu0 0.0
    %963 = vmatprep.subr.mxu0 0.0
    %964 = vmatpush1.xpose.msra.mxu0 0.0
    %965 = vmatprep.subr.mxu0 0.0
    %966 = vmatpush1.xpose.msra.mxu0 0.0
    %967 = vmatprep.subr.mxu0 0.0
    %968 = vmatpush1.xpose.msra.mxu0 0.0
    %969 = vmatprep.subr.mxu0 0.0
    %970 = vmatpush1.xpose.msra.mxu0 0.0
    %971 = vmatprep.subr.mxu0 0.0
    %972 = vmatpush1.xpose.msra.mxu0 %v939
    %973 = vmatprep.subr.mxu0 0.0
    %974 = vmatpush2.xpose.msra.mxu0 0.0
    %975 = vmatprep.subr.mxu0 0.0
    %976 = vmatpush2.xpose.msra.mxu0 0.0
    %977 = vmatprep.subr.mxu0 0.0
    %978 = vmatpush2.xpose.msra.mxu0 0.0
    %979 = vmatprep.subr.mxu0 0.0
    %980 = vmatpush2.xpose.msra.mxu0 0.0
    %981 = vmatprep.subr.mxu0 0.0
    %982 = vmatpush2.xpose.msra.mxu0 0.0
    %983 = vmatprep.subr.mxu0 0.0
    %984 = vmatpush2.xpose.msra.mxu0 0.0
    %985 = vmatprep.subr.mxu0 0.0
    %986 = vmatpush2.xpose.msra.mxu0 0.0
    %987 = vmatprep.subr.mxu0 0.0
    %988 = vmatpush2.xpose.msra.mxu0 0.0
    %989 = vmatprep.subr.mxu0 0.0
    %990 = vmatpush2.xpose.msra.mxu0 0.0
    %991 = vmatprep.subr.mxu0 0.0
    %992 = vmatpush2.xpose.msra.mxu0 0.0
    %993 = vmatprep.subr.mxu0 0.0
    %994 = vmatpush2.xpose.msra.mxu0 0.0
    %995 = vmatprep.subr.mxu0 0.0
    %996 = vmatpush2.xpose.msra.mxu0 0.0
    %997 = vmatprep.subr.mxu0 0.0
    %998 = vmatpush2.xpose.msra.mxu0 0.0
    %999 = vmatprep.subr.mxu0 0.0
    %1000 = vmatpush2.xpose.msra.mxu0 0.0
    %1001 = vmatprep.subr.mxu0 0.0
    %1002 = vmatpush2.xpose.msra.mxu0 0.0
    %1003 = vmatprep.subr.mxu0 0.0
    %1004 = vmatpush2.xpose.msra.mxu0 0.0
    %1005 = vmatprep.mubr.f32.mxu0 0.0
    %1006 = vmatmul.mubr.f32.gmra.mxu0 %v936
    %v1007 = vpop.f32.mrf.mxu0
    %v1008 = vadd.f32 0.0, %v1007
    %v1009 = vpop.f32.mrf.mxu0
    %1010 = vdwg.mxu0
    %v1012 = vsel %vm782, %v695, 0
    %v1015 = vsel %vm782, %v391, 0
    %1017 = vmatprep.subr.mxu0 0.0
    %1018 = vmatpush1.xpose.msra.mxu0 0.0
    %1019 = vmatprep.subr.mxu0 0.0
    %1020 = vmatpush1.xpose.msra.mxu0 0.0
    %1021 = vmatprep.subr.mxu0 0.0
    %1022 = vmatpush1.xpose.msra.mxu0 0.0
    %1023 = vmatprep.subr.mxu0 0.0
    %1024 = vmatpush1.xpose.msra.mxu0 0.0
    %1025 = vmatprep.subr.mxu0 0.0
    %1026 = vmatpush1.xpose.msra.mxu0 0.0
    %1027 = vmatprep.subr.mxu0 0.0
    %1028 = vmatpush1.xpose.msra.mxu0 0.0
    %1029 = vmatprep.subr.mxu0 0.0
    %1030 = vmatpush1.xpose.msra.mxu0 0.0
    %1031 = vmatprep.subr.mxu0 0.0
    %1032 = vmatpush1.xpose.msra.mxu0 0.0
    %1033 = vmatprep.subr.mxu0 0.0
    %1034 = vmatpush1.xpose.msra.mxu0 0.0
    %1035 = vmatprep.subr.mxu0 0.0
    %1036 = vmatpush1.xpose.msra.mxu0 0.0
    %1037 = vmatprep.subr.mxu0 0.0
    %1038 = vmatpush1.xpose.msra.mxu0 0.0
    %1039 = vmatprep.subr.mxu0 0.0
    %1040 = vmatpush1.xpose.msra.mxu0 0.0
    %1041 = vmatprep.subr.mxu0 0.0
    %1042 = vmatpush1.xpose.msra.mxu0 0.0
    %1043 = vmatprep.subr.mxu0 0.0
    %1044 = vmatpush1.xpose.msra.mxu0 0.0
    %1045 = vmatprep.subr.mxu0 0.0
    %1046 = vmatpush1.xpose.msra.mxu0 0.0
    %1047 = vmatprep.subr.mxu0 0.0
    %1048 = vmatpush1.xpose.msra.mxu0 %v1015
    %1049 = vmatprep.subr.mxu0 0.0
    %1050 = vmatpush2.xpose.msra.mxu0 0.0
    %1051 = vmatprep.subr.mxu0 0.0
    %1052 = vmatpush2.xpose.msra.mxu0 0.0
    %1053 = vmatprep.subr.mxu0 0.0
    %1054 = vmatpush2.xpose.msra.mxu0 0.0
    %1055 = vmatprep.subr.mxu0 0.0
    %1056 = vmatpush2.xpose.msra.mxu0 0.0
    %1057 = vmatprep.subr.mxu0 0.0
    %1058 = vmatpush2.xpose.msra.mxu0 0.0
    %1059 = vmatprep.subr.mxu0 0.0
    %1060 = vmatpush2.xpose.msra.mxu0 0.0
    %1061 = vmatprep.subr.mxu0 0.0
    %1062 = vmatpush2.xpose.msra.mxu0 0.0
    %1063 = vmatprep.subr.mxu0 0.0
    %1064 = vmatpush2.xpose.msra.mxu0 0.0
    %1065 = vmatprep.subr.mxu0 0.0
    %1066 = vmatpush2.xpose.msra.mxu0 0.0
    %1067 = vmatprep.subr.mxu0 0.0
    %1068 = vmatpush2.xpose.msra.mxu0 0.0
    %1069 = vmatprep.subr.mxu0 0.0
    %1070 = vmatpush2.xpose.msra.mxu0 0.0
    %1071 = vmatprep.subr.mxu0 0.0
    %1072 = vmatpush2.xpose.msra.mxu0 0.0
    %1073 = vmatprep.subr.mxu0 0.0
    %1074 = vmatpush2.xpose.msra.mxu0 0.0
    %1075 = vmatprep.subr.mxu0 0.0
    %1076 = vmatpush2.xpose.msra.mxu0 0.0
    %1077 = vmatprep.subr.mxu0 0.0
    %1078 = vmatpush2.xpose.msra.mxu0 0.0
    %1079 = vmatprep.subr.mxu0 0.0
    %1080 = vmatpush2.xpose.msra.mxu0 0.0
    %1081 = vmatprep.mubr.f32.mxu0 0.0
    %1082 = vmatmul.mubr.f32.gmra.mxu0 %v1012
    %v1083 = vpop.f32.mrf.mxu0
    %v1084 = vadd.f32 0.0, %v1083
    %v1085 = vpop.f32.mrf.mxu0
    %1086 = vdwg.mxu0
    %v1088 = vsel %vm782, %v760, 0
    %v1091 = vsel %vm782, %v456, 0
    %1093 = vmatprep.subr.mxu0 0.0
    %1094 = vmatpush1.xpose.msra.mxu0 0.0
    %1095 = vmatprep.subr.mxu0 0.0
    %1096 = vmatpush1.xpose.msra.mxu0 0.0
    %1097 = vmatprep.subr.mxu0 0.0
    %1098 = vmatpush1.xpose.msra.mxu0 0.0
    %1099 = vmatprep.subr.mxu0 0.0
    %1100 = vmatpush1.xpose.msra.mxu0 0.0
    %1101 = vmatprep.subr.mxu0 0.0
    %1102 = vmatpush1.xpose.msra.mxu0 0.0
    %1103 = vmatprep.subr.mxu0 0.0
    %1104 = vmatpush1.xpose.msra.mxu0 0.0
    %1105 = vmatprep.subr.mxu0 0.0
    %1106 = vmatpush1.xpose.msra.mxu0 0.0
    %1107 = vmatprep.subr.mxu0 0.0
    %1108 = vmatpush1.xpose.msra.mxu0 0.0
    %1109 = vmatprep.subr.mxu0 0.0
    %1110 = vmatpush1.xpose.msra.mxu0 0.0
    %1111 = vmatprep.subr.mxu0 0.0
    %1112 = vmatpush1.xpose.msra.mxu0 0.0
    %1113 = vmatprep.subr.mxu0 0.0
    %1114 = vmatpush1.xpose.msra.mxu0 0.0
    %1115 = vmatprep.subr.mxu0 0.0
    %1116 = vmatpush1.xpose.msra.mxu0 0.0
    %1117 = vmatprep.subr.mxu0 0.0
    %1118 = vmatpush1.xpose.msra.mxu0 0.0
    %1119 = vmatprep.subr.mxu0 0.0
    %1120 = vmatpush1.xpose.msra.mxu0 0.0
    %1121 = vmatprep.subr.mxu0 0.0
    %1122 = vmatpush1.xpose.msra.mxu0 0.0
    %1123 = vmatprep.subr.mxu0 0.0
    %1124 = vmatpush1.xpose.msra.mxu0 %v1091
    %1125 = vmatprep.subr.mxu0 0.0
    %1126 = vmatpush2.xpose.msra.mxu0 0.0
    %1127 = vmatprep.subr.mxu0 0.0
    %1128 = vmatpush2.xpose.msra.mxu0 0.0
    %1129 = vmatprep.subr.mxu0 0.0
    %1130 = vmatpush2.xpose.msra.mxu0 0.0
    %1131 = vmatprep.subr.mxu0 0.0
    %1132 = vmatpush2.xpose.msra.mxu0 0.0
    %1133 = vmatprep.subr.mxu0 0.0
    %1134 = vmatpush2.xpose.msra.mxu0 0.0
    %1135 = vmatprep.subr.mxu0 0.0
    %1136 = vmatpush2.xpose.msra.mxu0 0.0
    %1137 = vmatprep.subr.mxu0 0.0
    %1138 = vmatpush2.xpose.msra.mxu0 0.0
    %1139 = vmatprep.subr.mxu0 0.0
    %1140 = vmatpush2.xpose.msra.mxu0 0.0
    %1141 = vmatprep.subr.mxu0 0.0
    %1142 = vmatpush2.xpose.msra.mxu0 0.0
    %1143 = vmatprep.subr.mxu0 0.0
    %1144 = vmatpush2.xpose.msra.mxu0 0.0
    %1145 = vmatprep.subr.mxu0 0.0
    %1146 = vmatpush2.xpose.msra.mxu0 0.0
    %1147 = vmatprep.subr.mxu0 0.0
    %1148 = vmatpush2.xpose.msra.mxu0 0.0
    %1149 = vmatprep.subr.mxu0 0.0
    %1150 = vmatpush2.xpose.msra.mxu0 0.0
    %1151 = vmatprep.subr.mxu0 0.0
    %1152 = vmatpush2.xpose.msra.mxu0 0.0
    %1153 = vmatprep.subr.mxu0 0.0
    %1154 = vmatpush2.xpose.msra.mxu0 0.0
    %1155 = vmatprep.subr.mxu0 0.0
    %1156 = vmatpush2.xpose.msra.mxu0 0.0
    %1157 = vmatprep.mubr.f32.mxu0 0.0
    %1158 = vmatmul.mubr.f32.gmra.mxu0 %v1088
    %v1159 = vpop.f32.mrf.mxu0
    %v1160 = vadd.f32 0.0, %v1159
    %v1161 = vpop.f32.mrf.mxu0
    %1162 = vdwg.mxu0
    %v1164 = vsel %vm782, %v761, 0
    %v1167 = vsel %vm782, %v457, 0
    %1169 = vmatprep.subr.mxu0 0.0
    %1170 = vmatpush1.xpose.msra.mxu0 0.0
    %1171 = vmatprep.subr.mxu0 0.0
    %1172 = vmatpush1.xpose.msra.mxu0 0.0
    %1173 = vmatprep.subr.mxu0 0.0
    %1174 = vmatpush1.xpose.msra.mxu0 0.0
    %1175 = vmatprep.subr.mxu0 0.0
    %1176 = vmatpush1.xpose.msra.mxu0 0.0
    %1177 = vmatprep.subr.mxu0 0.0
    %1178 = vmatpush1.xpose.msra.mxu0 0.0
    %1179 = vmatprep.subr.mxu0 0.0
    %1180 = vmatpush1.xpose.msra.mxu0 0.0
    %1181 = vmatprep.subr.mxu0 0.0
    %1182 = vmatpush1.xpose.msra.mxu0 0.0
    %1183 = vmatprep.subr.mxu0 0.0
    %1184 = vmatpush1.xpose.msra.mxu0 0.0
    %1185 = vmatprep.subr.mxu0 0.0
    %1186 = vmatpush1.xpose.msra.mxu0 0.0
    %1187 = vmatprep.subr.mxu0 0.0
    %1188 = vmatpush1.xpose.msra.mxu0 0.0
    %1189 = vmatprep.subr.mxu0 0.0
    %1190 = vmatpush1.xpose.msra.mxu0 0.0
    %1191 = vmatprep.subr.mxu0 0.0
    %1192 = vmatpush1.xpose.msra.mxu0 0.0
    %1193 = vmatprep.subr.mxu0 0.0
    %1194 = vmatpush1.xpose.msra.mxu0 0.0
    %1195 = vmatprep.subr.mxu0 0.0
    %1196 = vmatpush1.xpose.msra.mxu0 0.0
    %1197 = vmatprep.subr.mxu0 0.0
    %1198 = vmatpush1.xpose.msra.mxu0 0.0
    %1199 = vmatprep.subr.mxu0 0.0
    %1200 = vmatpush1.xpose.msra.mxu0 %v1167
    %1201 = vmatprep.subr.mxu0 0.0
    %1202 = vmatpush2.xpose.msra.mxu0 0.0
    %1203 = vmatprep.subr.mxu0 0.0
    %1204 = vmatpush2.xpose.msra.mxu0 0.0
    %1205 = vmatprep.subr.mxu0 0.0
    %1206 = vmatpush2.xpose.msra.mxu0 0.0
    %1207 = vmatprep.subr.mxu0 0.0
    %1208 = vmatpush2.xpose.msra.mxu0 0.0
    %1209 = vmatprep.subr.mxu0 0.0
    %1210 = vmatpush2.xpose.msra.mxu0 0.0
    %1211 = vmatprep.subr.mxu0 0.0
    %1212 = vmatpush2.xpose.msra.mxu0 0.0
    %1213 = vmatprep.subr.mxu0 0.0
    %1214 = vmatpush2.xpose.msra.mxu0 0.0
    %1215 = vmatprep.subr.mxu0 0.0
    %1216 = vmatpush2.xpose.msra.mxu0 0.0
    %1217 = vmatprep.subr.mxu0 0.0
    %1218 = vmatpush2.xpose.msra.mxu0 0.0
    %1219 = vmatprep.subr.mxu0 0.0
    %1220 = vmatpush2.xpose.msra.mxu0 0.0
    %1221 = vmatprep.subr.mxu0 0.0
    %1222 = vmatpush2.xpose.msra.mxu0 0.0
    %1223 = vmatprep.subr.mxu0 0.0
    %1224 = vmatpush2.xpose.msra.mxu0 0.0
    %1225 = vmatprep.subr.mxu0 0.0
    %1226 = vmatpush2.xpose.msra.mxu0 0.0
    %1227 = vmatprep.subr.mxu0 0.0
    %1228 = vmatpush2.xpose.msra.mxu0 0.0
    %1229 = vmatprep.subr.mxu0 0.0
    %1230 = vmatpush2.xpose.msra.mxu0 0.0
    %1231 = vmatprep.subr.mxu0 0.0
    %1232 = vmatpush2.xpose.msra.mxu0 0.0
    %1233 = vmatprep.mubr.f32.mxu0 0.0
    %1234 = vmatmul.mubr.f32.gmra.mxu0 %v1164
    %v1235 = vpop.f32.mrf.mxu0
    %v1236 = vadd.f32 0.0, %v1235
    %v1237 = vpop.f32.mrf.mxu0
    %1238 = vdwg.mxu0
    %v1240 = vsel %vm782, %v762, 0
    %v1243 = vsel %vm782, %v458, 0
    %1245 = vmatprep.subr.mxu0 0.0
    %1246 = vmatpush1.xpose.msra.mxu0 0.0
    %1247 = vmatprep.subr.mxu0 0.0
    %1248 = vmatpush1.xpose.msra.mxu0 0.0
    %1249 = vmatprep.subr.mxu0 0.0
    %1250 = vmatpush1.xpose.msra.mxu0 0.0
    %1251 = vmatprep.subr.mxu0 0.0
    %1252 = vmatpush1.xpose.msra.mxu0 0.0
    %1253 = vmatprep.subr.mxu0 0.0
    %1254 = vmatpush1.xpose.msra.mxu0 0.0
    %1255 = vmatprep.subr.mxu0 0.0
    %1256 = vmatpush1.xpose.msra.mxu0 0.0
    %1257 = vmatprep.subr.mxu0 0.0
    %1258 = vmatpush1.xpose.msra.mxu0 0.0
    %1259 = vmatprep.subr.mxu0 0.0
    %1260 = vmatpush1.xpose.msra.mxu0 0.0
    %1261 = vmatprep.subr.mxu0 0.0
    %1262 = vmatpush1.xpose.msra.mxu0 0.0
    %1263 = vmatprep.subr.mxu0 0.0
    %1264 = vmatpush1.xpose.msra.mxu0 0.0
    %1265 = vmatprep.subr.mxu0 0.0
    %1266 = vmatpush1.xpose.msra.mxu0 0.0
    %1267 = vmatprep.subr.mxu0 0.0
    %1268 = vmatpush1.xpose.msra.mxu0 0.0
    %1269 = vmatprep.subr.mxu0 0.0
    %1270 = vmatpush1.xpose.msra.mxu0 0.0
    %1271 = vmatprep.subr.mxu0 0.0
    %1272 = vmatpush1.xpose.msra.mxu0 0.0
    %1273 = vmatprep.subr.mxu0 0.0
    %1274 = vmatpush1.xpose.msra.mxu0 0.0
    %1275 = vmatprep.subr.mxu0 0.0
    %1276 = vmatpush1.xpose.msra.mxu0 %v1243
    %1277 = vmatprep.subr.mxu0 0.0
    %1278 = vmatpush2.xpose.msra.mxu0 0.0
    %1279 = vmatprep.subr.mxu0 0.0
    %1280 = vmatpush2.xpose.msra.mxu0 0.0
    %1281 = vmatprep.subr.mxu0 0.0
    %1282 = vmatpush2.xpose.msra.mxu0 0.0
    %1283 = vmatprep.subr.mxu0 0.0
    %1284 = vmatpush2.xpose.msra.mxu0 0.0
    %1285 = vmatprep.subr.mxu0 0.0
    %1286 = vmatpush2.xpose.msra.mxu0 0.0
    %1287 = vmatprep.subr.mxu0 0.0
    %1288 = vmatpush2.xpose.msra.mxu0 0.0
    %1289 = vmatprep.subr.mxu0 0.0
    %1290 = vmatpush2.xpose.msra.mxu0 0.0
    %1291 = vmatprep.subr.mxu0 0.0
    %1292 = vmatpush2.xpose.msra.mxu0 0.0
    %1293 = vmatprep.subr.mxu0 0.0
    %1294 = vmatpush2.xpose.msra.mxu0 0.0
    %1295 = vmatprep.subr.mxu0 0.0
    %1296 = vmatpush2.xpose.msra.mxu0 0.0
    %1297 = vmatprep.subr.mxu0 0.0
    %1298 = vmatpush2.xpose.msra.mxu0 0.0
    %1299 = vmatprep.subr.mxu0 0.0
    %1300 = vmatpush2.xpose.msra.mxu0 0.0
    %1301 = vmatprep.subr.mxu0 0.0
    %1302 = vmatpush2.xpose.msra.mxu0 0.0
    %1303 = vmatprep.subr.mxu0 0.0
    %1304 = vmatpush2.xpose.msra.mxu0 0.0
    %1305 = vmatprep.subr.mxu0 0.0
    %1306 = vmatpush2.xpose.msra.mxu0 0.0
    %1307 = vmatprep.subr.mxu0 0.0
    %1308 = vmatpush2.xpose.msra.mxu0 0.0
    %1309 = vmatprep.mubr.f32.mxu0 0.0
    %1310 = vmatmul.mubr.f32.gmra.mxu0 %v1240
    %v1311 = vpop.f32.mrf.mxu0
    %v1312 = vadd.f32 0.0, %v1311
    %v1313 = vpop.f32.mrf.mxu0
    %1314 = vdwg.mxu0
    %v1316 = vsel %vm782, %v763, 0
    %v1319 = vsel %vm782, %v459, 0
    %1321 = vmatprep.subr.mxu0 0.0
    %1322 = vmatpush1.xpose.msra.mxu0 0.0
    %1323 = vmatprep.subr.mxu0 0.0
    %1324 = vmatpush1.xpose.msra.mxu0 0.0
    %1325 = vmatprep.subr.mxu0 0.0
    %1326 = vmatpush1.xpose.msra.mxu0 0.0
    %1327 = vmatprep.subr.mxu0 0.0
    %1328 = vmatpush1.xpose.msra.mxu0 0.0
    %1329 = vmatprep.subr.mxu0 0.0
    %1330 = vmatpush1.xpose.msra.mxu0 0.0
    %1331 = vmatprep.subr.mxu0 0.0
    %1332 = vmatpush1.xpose.msra.mxu0 0.0
    %1333 = vmatprep.subr.mxu0 0.0
    %1334 = vmatpush1.xpose.msra.mxu0 0.0
    %1335 = vmatprep.subr.mxu0 0.0
    %1336 = vmatpush1.xpose.msra.mxu0 0.0
    %1337 = vmatprep.subr.mxu0 0.0
    %1338 = vmatpush1.xpose.msra.mxu0 0.0
    %1339 = vmatprep.subr.mxu0 0.0
    %1340 = vmatpush1.xpose.msra.mxu0 0.0
    %1341 = vmatprep.subr.mxu0 0.0
    %1342 = vmatpush1.xpose.msra.mxu0 0.0
    %1343 = vmatprep.subr.mxu0 0.0
    %1344 = vmatpush1.xpose.msra.mxu0 0.0
    %1345 = vmatprep.subr.mxu0 0.0
    %1346 = vmatpush1.xpose.msra.mxu0 0.0
    %1347 = vmatprep.subr.mxu0 0.0
    %1348 = vmatpush1.xpose.msra.mxu0 0.0
    %1349 = vmatprep.subr.mxu0 0.0
    %1350 = vmatpush1.xpose.msra.mxu0 0.0
    %1351 = vmatprep.subr.mxu0 0.0
    %1352 = vmatpush1.xpose.msra.mxu0 %v1319
    %1353 = vmatprep.subr.mxu0 0.0
    %1354 = vmatpush2.xpose.msra.mxu0 0.0
    %1355 = vmatprep.subr.mxu0 0.0
    %1356 = vmatpush2.xpose.msra.mxu0 0.0
    %1357 = vmatprep.subr.mxu0 0.0
    %1358 = vmatpush2.xpose.msra.mxu0 0.0
    %1359 = vmatprep.subr.mxu0 0.0
    %1360 = vmatpush2.xpose.msra.mxu0 0.0
    %1361 = vmatprep.subr.mxu0 0.0
    %1362 = vmatpush2.xpose.msra.mxu0 0.0
    %1363 = vmatprep.subr.mxu0 0.0
    %1364 = vmatpush2.xpose.msra.mxu0 0.0
    %1365 = vmatprep.subr.mxu0 0.0
    %1366 = vmatpush2.xpose.msra.mxu0 0.0
    %1367 = vmatprep.subr.mxu0 0.0
    %1368 = vmatpush2.xpose.msra.mxu0 0.0
    %1369 = vmatprep.subr.mxu0 0.0
    %1370 = vmatpush2.xpose.msra.mxu0 0.0
    %1371 = vmatprep.subr.mxu0 0.0
    %1372 = vmatpush2.xpose.msra.mxu0 0.0
    %1373 = vmatprep.subr.mxu0 0.0
    %1374 = vmatpush2.xpose.msra.mxu0 0.0
    %1375 = vmatprep.subr.mxu0 0.0
    %1376 = vmatpush2.xpose.msra.mxu0 0.0
    %1377 = vmatprep.subr.mxu0 0.0
    %1378 = vmatpush2.xpose.msra.mxu0 0.0
    %1379 = vmatprep.subr.mxu0 0.0
    %1380 = vmatpush2.xpose.msra.mxu0 0.0
    %1381 = vmatprep.subr.mxu0 0.0
    %1382 = vmatpush2.xpose.msra.mxu0 0.0
    %1383 = vmatprep.subr.mxu0 0.0
    %1384 = vmatpush2.xpose.msra.mxu0 0.0
    %1385 = vmatprep.mubr.f32.mxu0 0.0
    %1386 = vmatmul.mubr.f32.gmra.mxu0 %v1316
    %v1387 = vpop.f32.mrf.mxu0
    %v1388 = vadd.f32 0.0, %v1387
    %v1389 = vpop.f32.mrf.mxu0
    %1390 = vdwg.mxu0
    %v1391 = vadd.f32 %v856, %v773
    %v1392 = vadd.f32 %v932, %v773
    %v1393 = vadd.f32 %v1008, %v773
    %v1394 = vadd.f32 %v1084, %v773
    %v1395 = vadd.f32 %v1160, %v780
    %v1396 = vadd.f32 %v1236, %v780
    %v1397 = vadd.f32 %v1312, %v780
    %v1398 = vadd.f32 %v1388, %v780
    %v1399 = vsel %vm782, %v1391, -inf
    %1400 = vmax.xlane.f32.xlu0 %v1399
    %v1401 = vpop.xlane.xlu0 %1400
    %v1402 = vsel %vm782, %v1392, -inf
    %1403 = vmax.xlane.f32.xlu0 %v1402
    %v1404 = vpop.xlane.xlu0 %1403
    %v1405 = vsel %vm782, %v1393, -inf
    %1406 = vmax.xlane.f32.xlu0 %v1405
    %v1407 = vpop.xlane.xlu0 %1406
    %v1408 = vsel %vm782, %v1394, -inf
    %1409 = vmax.xlane.f32.xlu0 %v1408
    %v1410 = vpop.xlane.xlu0 %1409
    %v1411 = vsel %vm782, %v1395, -inf
    %1412 = vmax.xlane.f32.xlu0 %v1411
    %v1413 = vpop.xlane.xlu0 %1412
    %v1414 = vsel %vm782, %v1396, -inf
    %1415 = vmax.xlane.f32.xlu0 %v1414
    %v1416 = vpop.xlane.xlu0 %1415
    %v1417 = vsel %vm782, %v1397, -inf
    %1418 = vmax.xlane.f32.xlu0 %v1417
    %v1419 = vpop.xlane.xlu0 %1418
    %v1420 = vsel %vm782, %v1398, -inf
    %1421 = vmax.xlane.f32.xlu0 %v1420
    %v1422 = vpop.xlane.xlu0 %1421
    %v1423 = vsub.f32 %v1391, %v1401
    %v1424 = vsub.f32 %v1392, %v1404
    %v1425 = vsub.f32 %v1393, %v1407
    %v1426 = vsub.f32 %v1394, %v1410
    %v1427 = vsub.f32 %v1395, %v1413
    %v1428 = vsub.f32 %v1396, %v1416
    %v1429 = vsub.f32 %v1397, %v1419
    %v1430 = vsub.f32 %v1398, %v1422
    %v1431 = vmul.f32 %v1423, 1.442695
    %v1432 = vpow.pop %v1431
    %v1433 = vmul.f32 %v1424, 1.442695
    %v1434 = vpow.pop %v1433
    %v1435 = vmul.f32 %v1425, 1.442695
    %v1436 = vpow.pop %v1435
    %v1437 = vmul.f32 %v1426, 1.442695
    %v1438 = vpow.pop %v1437
    %v1439 = vmul.f32 %v1427, 1.442695
    %v1440 = vpow.pop %v1439
    %v1441 = vmul.f32 %v1428, 1.442695
    %v1442 = vpow.pop %v1441
    %v1443 = vmul.f32 %v1429, 1.442695
    %v1444 = vpow.pop %v1443
    %v1445 = vmul.f32 %v1430, 1.442695
    %v1446 = vpow.pop %v1445
    %v1447 = vsel %vm782, %v1432, 0.0
    %1448 = vadd.xlane.f32.xlu0 %v1447
    %v1449 = vpop.xlane.xlu0 %1448
    %v1450 = vsel %vm782, %v1434, 0.0
    %1451 = vadd.xlane.f32.xlu0 %v1450
    %v1452 = vpop.xlane.xlu0 %1451
    %v1453 = vsel %vm782, %v1436, 0.0
    %1454 = vadd.xlane.f32.xlu0 %v1453
    %v1455 = vpop.xlane.xlu0 %1454
    %v1456 = vsel %vm782, %v1438, 0.0
    %1457 = vadd.xlane.f32.xlu0 %v1456
    %v1458 = vpop.xlane.xlu0 %1457
    %v1459 = vsel %vm782, %v1440, 0.0
    %1460 = vadd.xlane.f32.xlu0 %v1459
    %v1461 = vpop.xlane.xlu0 %1460
    %v1462 = vsel %vm782, %v1442, 0.0
    %1463 = vadd.xlane.f32.xlu0 %v1462
    %v1464 = vpop.xlane.xlu0 %1463
    %v1465 = vsel %vm782, %v1444, 0.0
    %1466 = vadd.xlane.f32.xlu0 %v1465
    %v1467 = vpop.xlane.xlu0 %1466
    %v1468 = vsel %vm782, %v1446, 0.0
    %1469 = vadd.xlane.f32.xlu0 %v1468
    %v1470 = vpop.xlane.xlu0 %1469
    %v1471 = vrcp.pop %v1449
    %v1472 = vmul.f32 %v1432, %v1471
    %v1473 = vrcp.pop %v1452
    %v1474 = vmul.f32 %v1434, %v1473
    %v1475 = vrcp.pop %v1455
    %v1476 = vmul.f32 %v1436, %v1475
    %v1477 = vrcp.pop %v1458
    %v1478 = vmul.f32 %v1438, %v1477
    %v1479 = vrcp.pop %v1461
    %v1480 = vmul.f32 %v1440, %v1479
    %v1481 = vrcp.pop %v1464
    %v1482 = vmul.f32 %v1442, %v1481
    %v1483 = vrcp.pop %v1467
    %v1484 = vmul.f32 %v1444, %v1483
    %v1485 = vrcp.pop %v1470
    %v1486 = vmul.f32 %v1446, %v1485
    %1488 = vset.pattern.permute.xlu0 0
    %1489 = vperm.xlu0 %1488, %v774
    %v1490 = vpop.permute.xlu0 %1489
    %1493 = vset.pattern.permute.xlu0 0
    %1494 = vperm.xlu0 %1493, %v781
    %v1495 = vpop.permute.xlu0 %1494
    %v1497 = vmul.f32 %v1472, %v1490
    %v1498 = vmul.f32 %v1474, %v1490
    %v1499 = vmul.f32 %v1476, %v1490
    %v1500 = vmul.f32 %v1478, %v1490
    %v1501 = vmul.f32 %v1480, %v1495
    %v1502 = vmul.f32 %v1482, %v1495
    %v1503 = vmul.f32 %v1484, %v1495
    %v1504 = vmul.f32 %v1486, %v1495
    %1505 = vrot.lane.b32.xlu0 %v388, 120
    %v1506 = vpop.permute.xlu0 %1505
    %v1509 = vsel %vm782, %v1497, 0
    %1511 = vmatprep.subr.mxu0 0.0
    %1512 = vmatpush1.msra.mxu0 0.0
    %1513 = vmatprep.subr.mxu0 0.0
    %1514 = vmatpush1.msra.mxu0 0.0
    %1515 = vmatprep.subr.mxu0 0.0
    %1516 = vmatpush1.msra.mxu0 0.0
    %1517 = vmatprep.subr.mxu0 0.0
    %1518 = vmatpush1.msra.mxu0 0.0
    %1519 = vmatprep.subr.mxu0 0.0
    %1520 = vmatpush1.msra.mxu0 0.0
    %1521 = vmatprep.subr.mxu0 0.0
    %1522 = vmatpush1.msra.mxu0 0.0
    %1523 = vmatprep.subr.mxu0 0.0
    %1524 = vmatpush1.msra.mxu0 0.0
    %1525 = vmatprep.subr.mxu0 0.0
    %1526 = vmatpush1.msra.mxu0 0.0
    %1527 = vmatprep.subr.mxu0 0.0
    %1528 = vmatpush1.msra.mxu0 0.0
    %1529 = vmatprep.subr.mxu0 0.0
    %1530 = vmatpush1.msra.mxu0 0.0
    %1531 = vmatprep.subr.mxu0 0.0
    %1532 = vmatpush1.msra.mxu0 0.0
    %1533 = vmatprep.subr.mxu0 0.0
    %1534 = vmatpush1.msra.mxu0 0.0
    %1535 = vmatprep.subr.mxu0 0.0
    %1536 = vmatpush1.msra.mxu0 0.0
    %1537 = vmatprep.subr.mxu0 0.0
    %1538 = vmatpush1.msra.mxu0 0.0
    %1539 = vmatprep.subr.mxu0 0.0
    %1540 = vmatpush1.msra.mxu0 0.0
    %1541 = vmatprep.subr.mxu0 0.0
    %1542 = vmatpush1.msra.mxu0 %v1506
    %1543 = vmatprep.subr.mxu0 0.0
    %1544 = vmatpush2.msra.mxu0 0.0
    %1545 = vmatprep.subr.mxu0 0.0
    %1546 = vmatpush2.msra.mxu0 0.0
    %1547 = vmatprep.subr.mxu0 0.0
    %1548 = vmatpush2.msra.mxu0 0.0
    %1549 = vmatprep.subr.mxu0 0.0
    %1550 = vmatpush2.msra.mxu0 0.0
    %1551 = vmatprep.subr.mxu0 0.0
    %1552 = vmatpush2.msra.mxu0 0.0
    %1553 = vmatprep.subr.mxu0 0.0
    %1554 = vmatpush2.msra.mxu0 0.0
    %1555 = vmatprep.subr.mxu0 0.0
    %1556 = vmatpush2.msra.mxu0 0.0
    %1557 = vmatprep.subr.mxu0 0.0
    %1558 = vmatpush2.msra.mxu0 0.0
    %1559 = vmatprep.subr.mxu0 0.0
    %1560 = vmatpush2.msra.mxu0 0.0
    %1561 = vmatprep.subr.mxu0 0.0
    %1562 = vmatpush2.msra.mxu0 0.0
    %1563 = vmatprep.subr.mxu0 0.0
    %1564 = vmatpush2.msra.mxu0 0.0
    %1565 = vmatprep.subr.mxu0 0.0
    %1566 = vmatpush2.msra.mxu0 0.0
    %1567 = vmatprep.subr.mxu0 0.0
    %1568 = vmatpush2.msra.mxu0 0.0
    %1569 = vmatprep.subr.mxu0 0.0
    %1570 = vmatpush2.msra.mxu0 0.0
    %1571 = vmatprep.subr.mxu0 0.0
    %1572 = vmatpush2.msra.mxu0 0.0
    %1573 = vmatprep.subr.mxu0 0.0
    %1574 = vmatpush2.msra.mxu0 0.0
    %1575 = vmatprep.mubr.f32.mxu0 0.0
    %1576 = vmatmul.mubr.f32.gmra.mxu0 %v1509
    %v1577 = vpop.f32.mrf.mxu0
    %v1578 = vadd.f32 0.0, %v1577
    %v1579 = vpop.f32.mrf.mxu0
    %1580 = vdwg.mxu0
    %1581 = vrot.lane.b32.xlu0 %v389, 120
    %v1582 = vpop.permute.xlu0 %1581
    %v1585 = vsel %vm782, %v1498, 0
    %1587 = vmatprep.subr.mxu0 0.0
    %1588 = vmatpush1.msra.mxu0 0.0
    %1589 = vmatprep.subr.mxu0 0.0
    %1590 = vmatpush1.msra.mxu0 0.0
    %1591 = vmatprep.subr.mxu0 0.0
    %1592 = vmatpush1.msra.mxu0 0.0
    %1593 = vmatprep.subr.mxu0 0.0
    %1594 = vmatpush1.msra.mxu0 0.0
    %1595 = vmatprep.subr.mxu0 0.0
    %1596 = vmatpush1.msra.mxu0 0.0
    %1597 = vmatprep.subr.mxu0 0.0
    %1598 = vmatpush1.msra.mxu0 0.0
    %1599 = vmatprep.subr.mxu0 0.0
    %1600 = vmatpush1.msra.mxu0 0.0
    %1601 = vmatprep.subr.mxu0 0.0
    %1602 = vmatpush1.msra.mxu0 0.0
    %1603 = vmatprep.subr.mxu0 0.0
    %1604 = vmatpush1.msra.mxu0 0.0
    %1605 = vmatprep.subr.mxu0 0.0
    %1606 = vmatpush1.msra.mxu0 0.0
    %1607 = vmatprep.subr.mxu0 0.0
    %1608 = vmatpush1.msra.mxu0 0.0
    %1609 = vmatprep.subr.mxu0 0.0
    %1610 = vmatpush1.msra.mxu0 0.0
    %1611 = vmatprep.subr.mxu0 0.0
    %1612 = vmatpush1.msra.mxu0 0.0
    %1613 = vmatprep.subr.mxu0 0.0
    %1614 = vmatpush1.msra.mxu0 0.0
    %1615 = vmatprep.subr.mxu0 0.0
    %1616 = vmatpush1.msra.mxu0 0.0
    %1617 = vmatprep.subr.mxu0 0.0
    %1618 = vmatpush1.msra.mxu0 %v1582
    %1619 = vmatprep.subr.mxu0 0.0
    %1620 = vmatpush2.msra.mxu0 0.0
    %1621 = vmatprep.subr.mxu0 0.0
    %1622 = vmatpush2.msra.mxu0 0.0
    %1623 = vmatprep.subr.mxu0 0.0
    %1624 = vmatpush2.msra.mxu0 0.0
    %1625 = vmatprep.subr.mxu0 0.0
    %1626 = vmatpush2.msra.mxu0 0.0
    %1627 = vmatprep.subr.mxu0 0.0
    %1628 = vmatpush2.msra.mxu0 0.0
    %1629 = vmatprep.subr.mxu0 0.0
    %1630 = vmatpush2.msra.mxu0 0.0
    %1631 = vmatprep.subr.mxu0 0.0
    %1632 = vmatpush2.msra.mxu0 0.0
    %1633 = vmatprep.subr.mxu0 0.0
    %1634 = vmatpush2.msra.mxu0 0.0
    %1635 = vmatprep.subr.mxu0 0.0
    %1636 = vmatpush2.msra.mxu0 0.0
    %1637 = vmatprep.subr.mxu0 0.0
    %1638 = vmatpush2.msra.mxu0 0.0
    %1639 = vmatprep.subr.mxu0 0.0
    %1640 = vmatpush2.msra.mxu0 0.0
    %1641 = vmatprep.subr.mxu0 0.0
    %1642 = vmatpush2.msra.mxu0 0.0
    %1643 = vmatprep.subr.mxu0 0.0
    %1644 = vmatpush2.msra.mxu0 0.0
    %1645 = vmatprep.subr.mxu0 0.0
    %1646 = vmatpush2.msra.mxu0 0.0
    %1647 = vmatprep.subr.mxu0 0.0
    %1648 = vmatpush2.msra.mxu0 0.0
    %1649 = vmatprep.subr.mxu0 0.0
    %1650 = vmatpush2.msra.mxu0 0.0
    %1651 = vmatprep.mubr.f32.mxu0 0.0
    %1652 = vmatmul.mubr.f32.gmra.mxu0 %v1585
    %v1653 = vpop.f32.mrf.mxu0
    %v1654 = vadd.f32 0.0, %v1653
    %v1655 = vpop.f32.mrf.mxu0
    %1656 = vdwg.mxu0
    %1657 = vrot.lane.b32.xlu0 %v390, 120
    %v1658 = vpop.permute.xlu0 %1657
    %v1661 = vsel %vm782, %v1499, 0
    %1663 = vmatprep.subr.mxu0 0.0
    %1664 = vmatpush1.msra.mxu0 0.0
    %1665 = vmatprep.subr.mxu0 0.0
    %1666 = vmatpush1.msra.mxu0 0.0
    %1667 = vmatprep.subr.mxu0 0.0
    %1668 = vmatpush1.msra.mxu0 0.0
    %1669 = vmatprep.subr.mxu0 0.0
    %1670 = vmatpush1.msra.mxu0 0.0
    %1671 = vmatprep.subr.mxu0 0.0
    %1672 = vmatpush1.msra.mxu0 0.0
    %1673 = vmatprep.subr.mxu0 0.0
    %1674 = vmatpush1.msra.mxu0 0.0
    %1675 = vmatprep.subr.mxu0 0.0
    %1676 = vmatpush1.msra.mxu0 0.0
    %1677 = vmatprep.subr.mxu0 0.0
    %1678 = vmatpush1.msra.mxu0 0.0
    %1679 = vmatprep.subr.mxu0 0.0
    %1680 = vmatpush1.msra.mxu0 0.0
    %1681 = vmatprep.subr.mxu0 0.0
    %1682 = vmatpush1.msra.mxu0 0.0
    %1683 = vmatprep.subr.mxu0 0.0
    %1684 = vmatpush1.msra.mxu0 0.0
    %1685 = vmatprep.subr.mxu0 0.0
    %1686 = vmatpush1.msra.mxu0 0.0
    %1687 = vmatprep.subr.mxu0 0.0
    %1688 = vmatpush1.msra.mxu0 0.0
    %1689 = vmatprep.subr.mxu0 0.0
    %1690 = vmatpush1.msra.mxu0 0.0
    %1691 = vmatprep.subr.mxu0 0.0
    %1692 = vmatpush1.msra.mxu0 0.0
    %1693 = vmatprep.subr.mxu0 0.0
    %1694 = vmatpush1.msra.mxu0 %v1658
    %1695 = vmatprep.subr.mxu0 0.0
    %1696 = vmatpush2.msra.mxu0 0.0
    %1697 = vmatprep.subr.mxu0 0.0
    %1698 = vmatpush2.msra.mxu0 0.0
    %1699 = vmatprep.subr.mxu0 0.0
    %1700 = vmatpush2.msra.mxu0 0.0
    %1701 = vmatprep.subr.mxu0 0.0
    %1702 = vmatpush2.msra.mxu0 0.0
    %1703 = vmatprep.subr.mxu0 0.0
    %1704 = vmatpush2.msra.mxu0 0.0
    %1705 = vmatprep.subr.mxu0 0.0
    %1706 = vmatpush2.msra.mxu0 0.0
    %1707 = vmatprep.subr.mxu0 0.0
    %1708 = vmatpush2.msra.mxu0 0.0
    %1709 = vmatprep.subr.mxu0 0.0
    %1710 = vmatpush2.msra.mxu0 0.0
    %1711 = vmatprep.subr.mxu0 0.0
    %1712 = vmatpush2.msra.mxu0 0.0
    %1713 = vmatprep.subr.mxu0 0.0
    %1714 = vmatpush2.msra.mxu0 0.0
    %1715 = vmatprep.subr.mxu0 0.0
    %1716 = vmatpush2.msra.mxu0 0.0
    %1717 = vmatprep.subr.mxu0 0.0
    %1718 = vmatpush2.msra.mxu0 0.0
    %1719 = vmatprep.subr.mxu0 0.0
    %1720 = vmatpush2.msra.mxu0 0.0
    %1721 = vmatprep.subr.mxu0 0.0
    %1722 = vmatpush2.msra.mxu0 0.0
    %1723 = vmatprep.subr.mxu0 0.0
    %1724 = vmatpush2.msra.mxu0 0.0
    %1725 = vmatprep.subr.mxu0 0.0
    %1726 = vmatpush2.msra.mxu0 0.0
    %1727 = vmatprep.mubr.f32.mxu0 0.0
    %1728 = vmatmul.mubr.f32.gmra.mxu0 %v1661
    %v1729 = vpop.f32.mrf.mxu0
    %v1730 = vadd.f32 0.0, %v1729
    %v1731 = vpop.f32.mrf.mxu0
    %1732 = vdwg.mxu0
    %1733 = vrot.lane.b32.xlu0 %v391, 120
    %v1734 = vpop.permute.xlu0 %1733
    %v1737 = vsel %vm782, %v1500, 0
    %1739 = vmatprep.subr.mxu0 0.0
    %1740 = vmatpush1.msra.mxu0 0.0
    %1741 = vmatprep.subr.mxu0 0.0
    %1742 = vmatpush1.msra.mxu0 0.0
    %1743 = vmatprep.subr.mxu0 0.0
    %1744 = vmatpush1.msra.mxu0 0.0
    %1745 = vmatprep.subr.mxu0 0.0
    %1746 = vmatpush1.msra.mxu0 0.0
    %1747 = vmatprep.subr.mxu0 0.0
    %1748 = vmatpush1.msra.mxu0 0.0
    %1749 = vmatprep.subr.mxu0 0.0
    %1750 = vmatpush1.msra.mxu0 0.0
    %1751 = vmatprep.subr.mxu0 0.0
    %1752 = vmatpush1.msra.mxu0 0.0
    %1753 = vmatprep.subr.mxu0 0.0
    %1754 = vmatpush1.msra.mxu0 0.0
    %1755 = vmatprep.subr.mxu0 0.0
    %1756 = vmatpush1.msra.mxu0 0.0
    %1757 = vmatprep.subr.mxu0 0.0
    %1758 = vmatpush1.msra.mxu0 0.0
    %1759 = vmatprep.subr.mxu0 0.0
    %1760 = vmatpush1.msra.mxu0 0.0
    %1761 = vmatprep.subr.mxu0 0.0
    %1762 = vmatpush1.msra.mxu0 0.0
    %1763 = vmatprep.subr.mxu0 0.0
    %1764 = vmatpush1.msra.mxu0 0.0
    %1765 = vmatprep.subr.mxu0 0.0
    %1766 = vmatpush1.msra.mxu0 0.0
    %1767 = vmatprep.subr.mxu0 0.0
    %1768 = vmatpush1.msra.mxu0 0.0
    %1769 = vmatprep.subr.mxu0 0.0
    %1770 = vmatpush1.msra.mxu0 %v1734
    %1771 = vmatprep.subr.mxu0 0.0
    %1772 = vmatpush2.msra.mxu0 0.0
    %1773 = vmatprep.subr.mxu0 0.0
    %1774 = vmatpush2.msra.mxu0 0.0
    %1775 = vmatprep.subr.mxu0 0.0
    %1776 = vmatpush2.msra.mxu0 0.0
    %1777 = vmatprep.subr.mxu0 0.0
    %1778 = vmatpush2.msra.mxu0 0.0
    %1779 = vmatprep.subr.mxu0 0.0
    %1780 = vmatpush2.msra.mxu0 0.0
    %1781 = vmatprep.subr.mxu0 0.0
    %1782 = vmatpush2.msra.mxu0 0.0
    %1783 = vmatprep.subr.mxu0 0.0
    %1784 = vmatpush2.msra.mxu0 0.0
    %1785 = vmatprep.subr.mxu0 0.0
    %1786 = vmatpush2.msra.mxu0 0.0
    %1787 = vmatprep.subr.mxu0 0.0
    %1788 = vmatpush2.msra.mxu0 0.0
    %1789 = vmatprep.subr.mxu0 0.0
    %1790 = vmatpush2.msra.mxu0 0.0
    %1791 = vmatprep.subr.mxu0 0.0
    %1792 = vmatpush2.msra.mxu0 0.0
    %1793 = vmatprep.subr.mxu0 0.0
    %1794 = vmatpush2.msra.mxu0 0.0
    %1795 = vmatprep.subr.mxu0 0.0
    %1796 = vmatpush2.msra.mxu0 0.0
    %1797 = vmatprep.subr.mxu0 0.0
    %1798 = vmatpush2.msra.mxu0 0.0
    %1799 = vmatprep.subr.mxu0 0.0
    %1800 = vmatpush2.msra.mxu0 0.0
    %1801 = vmatprep.subr.mxu0 0.0
    %1802 = vmatpush2.msra.mxu0 0.0
    %1803 = vmatprep.mubr.f32.mxu0 0.0
    %1804 = vmatmul.mubr.f32.gmra.mxu0 %v1737
    %v1805 = vpop.f32.mrf.mxu0
    %v1806 = vadd.f32 0.0, %v1805
    %v1807 = vpop.f32.mrf.mxu0
    %1808 = vdwg.mxu0
    %1809 = vrot.lane.b32.xlu0 %v456, 120
    %v1810 = vpop.permute.xlu0 %1809
    %v1813 = vsel %vm782, %v1501, 0
    %1815 = vmatprep.subr.mxu0 0.0
    %1816 = vmatpush1.msra.mxu0 0.0
    %1817 = vmatprep.subr.mxu0 0.0
    %1818 = vmatpush1.msra.mxu0 0.0
    %1819 = vmatprep.subr.mxu0 0.0
    %1820 = vmatpush1.msra.mxu0 0.0
    %1821 = vmatprep.subr.mxu0 0.0
    %1822 = vmatpush1.msra.mxu0 0.0
    %1823 = vmatprep.subr.mxu0 0.0
    %1824 = vmatpush1.msra.mxu0 0.0
    %1825 = vmatprep.subr.mxu0 0.0
    %1826 = vmatpush1.msra.mxu0 0.0
    %1827 = vmatprep.subr.mxu0 0.0
    %1828 = vmatpush1.msra.mxu0 0.0
    %1829 = vmatprep.subr.mxu0 0.0
    %1830 = vmatpush1.msra.mxu0 0.0
    %1831 = vmatprep.subr.mxu0 0.0
    %1832 = vmatpush1.msra.mxu0 0.0
    %1833 = vmatprep.subr.mxu0 0.0
    %1834 = vmatpush1.msra.mxu0 0.0
    %1835 = vmatprep.subr.mxu0 0.0
    %1836 = vmatpush1.msra.mxu0 0.0
    %1837 = vmatprep.subr.mxu0 0.0
    %1838 = vmatpush1.msra.mxu0 0.0
    %1839 = vmatprep.subr.mxu0 0.0
    %1840 = vmatpush1.msra.mxu0 0.0
    %1841 = vmatprep.subr.mxu0 0.0
    %1842 = vmatpush1.msra.mxu0 0.0
    %1843 = vmatprep.subr.mxu0 0.0
    %1844 = vmatpush1.msra.mxu0 0.0
    %1845 = vmatprep.subr.mxu0 0.0
    %1846 = vmatpush1.msra.mxu0 %v1810
    %1847 = vmatprep.subr.mxu0 0.0
    %1848 = vmatpush2.msra.mxu0 0.0
    %1849 = vmatprep.subr.mxu0 0.0
    %1850 = vmatpush2.msra.mxu0 0.0
    %1851 = vmatprep.subr.mxu0 0.0
    %1852 = vmatpush2.msra.mxu0 0.0
    %1853 = vmatprep.subr.mxu0 0.0
    %1854 = vmatpush2.msra.mxu0 0.0
    %1855 = vmatprep.subr.mxu0 0.0
    %1856 = vmatpush2.msra.mxu0 0.0
    %1857 = vmatprep.subr.mxu0 0.0
    %1858 = vmatpush2.msra.mxu0 0.0
    %1859 = vmatprep.subr.mxu0 0.0
    %1860 = vmatpush2.msra.mxu0 0.0
    %1861 = vmatprep.subr.mxu0 0.0
    %1862 = vmatpush2.msra.mxu0 0.0
    %1863 = vmatprep.subr.mxu0 0.0
    %1864 = vmatpush2.msra.mxu0 0.0
    %1865 = vmatprep.subr.mxu0 0.0
    %1866 = vmatpush2.msra.mxu0 0.0
    %1867 = vmatprep.subr.mxu0 0.0
    %1868 = vmatpush2.msra.mxu0 0.0
    %1869 = vmatprep.subr.mxu0 0.0
    %1870 = vmatpush2.msra.mxu0 0.0
    %1871 = vmatprep.subr.mxu0 0.0
    %1872 = vmatpush2.msra.mxu0 0.0
    %1873 = vmatprep.subr.mxu0 0.0
    %1874 = vmatpush2.msra.mxu0 0.0
    %1875 = vmatprep.subr.mxu0 0.0
    %1876 = vmatpush2.msra.mxu0 0.0
    %1877 = vmatprep.subr.mxu0 0.0
    %1878 = vmatpush2.msra.mxu0 0.0
    %1879 = vmatprep.mubr.f32.mxu0 0.0
    %1880 = vmatmul.mubr.f32.gmra.mxu0 %v1813
    %v1881 = vpop.f32.mrf.mxu0
    %v1882 = vadd.f32 0.0, %v1881
    %v1883 = vpop.f32.mrf.mxu0
    %1884 = vdwg.mxu0
    %1885 = vrot.lane.b32.xlu0 %v457, 120
    %v1886 = vpop.permute.xlu0 %1885
    %v1889 = vsel %vm782, %v1502, 0
    %1891 = vmatprep.subr.mxu0 0.0
    %1892 = vmatpush1.msra.mxu0 0.0
    %1893 = vmatprep.subr.mxu0 0.0
    %1894 = vmatpush1.msra.mxu0 0.0
    %1895 = vmatprep.subr.mxu0 0.0
    %1896 = vmatpush1.msra.mxu0 0.0
    %1897 = vmatprep.subr.mxu0 0.0
    %1898 = vmatpush1.msra.mxu0 0.0
    %1899 = vmatprep.subr.mxu0 0.0
    %1900 = vmatpush1.msra.mxu0 0.0
    %1901 = vmatprep.subr.mxu0 0.0
    %1902 = vmatpush1.msra.mxu0 0.0
    %1903 = vmatprep.subr.mxu0 0.0
    %1904 = vmatpush1.msra.mxu0 0.0
    %1905 = vmatprep.subr.mxu0 0.0
    %1906 = vmatpush1.msra.mxu0 0.0
    %1907 = vmatprep.subr.mxu0 0.0
    %1908 = vmatpush1.msra.mxu0 0.0
    %1909 = vmatprep.subr.mxu0 0.0
    %1910 = vmatpush1.msra.mxu0 0.0
    %1911 = vmatprep.subr.mxu0 0.0
    %1912 = vmatpush1.msra.mxu0 0.0
    %1913 = vmatprep.subr.mxu0 0.0
    %1914 = vmatpush1.msra.mxu0 0.0
    %1915 = vmatprep.subr.mxu0 0.0
    %1916 = vmatpush1.msra.mxu0 0.0
    %1917 = vmatprep.subr.mxu0 0.0
    %1918 = vmatpush1.msra.mxu0 0.0
    %1919 = vmatprep.subr.mxu0 0.0
    %1920 = vmatpush1.msra.mxu0 0.0
    %1921 = vmatprep.subr.mxu0 0.0
    %1922 = vmatpush1.msra.mxu0 %v1886
    %1923 = vmatprep.subr.mxu0 0.0
    %1924 = vmatpush2.msra.mxu0 0.0
    %1925 = vmatprep.subr.mxu0 0.0
    %1926 = vmatpush2.msra.mxu0 0.0
    %1927 = vmatprep.subr.mxu0 0.0
    %1928 = vmatpush2.msra.mxu0 0.0
    %1929 = vmatprep.subr.mxu0 0.0
    %1930 = vmatpush2.msra.mxu0 0.0
    %1931 = vmatprep.subr.mxu0 0.0
    %1932 = vmatpush2.msra.mxu0 0.0
    %1933 = vmatprep.subr.mxu0 0.0
    %1934 = vmatpush2.msra.mxu0 0.0
    %1935 = vmatprep.subr.mxu0 0.0
    %1936 = vmatpush2.msra.mxu0 0.0
    %1937 = vmatprep.subr.mxu0 0.0
    %1938 = vmatpush2.msra.mxu0 0.0
    %1939 = vmatprep.subr.mxu0 0.0
    %1940 = vmatpush2.msra.mxu0 0.0
    %1941 = vmatprep.subr.mxu0 0.0
    %1942 = vmatpush2.msra.mxu0 0.0
    %1943 = vmatprep.subr.mxu0 0.0
    %1944 = vmatpush2.msra.mxu0 0.0
    %1945 = vmatprep.subr.mxu0 0.0
    %1946 = vmatpush2.msra.mxu0 0.0
    %1947 = vmatprep.subr.mxu0 0.0
    %1948 = vmatpush2.msra.mxu0 0.0
    %1949 = vmatprep.subr.mxu0 0.0
    %1950 = vmatpush2.msra.mxu0 0.0
    %1951 = vmatprep.subr.mxu0 0.0
    %1952 = vmatpush2.msra.mxu0 0.0
    %1953 = vmatprep.subr.mxu0 0.0
    %1954 = vmatpush2.msra.mxu0 0.0
    %1955 = vmatprep.mubr.f32.mxu0 0.0
    %1956 = vmatmul.mubr.f32.gmra.mxu0 %v1889
    %v1957 = vpop.f32.mrf.mxu0
    %v1958 = vadd.f32 0.0, %v1957
    %v1959 = vpop.f32.mrf.mxu0
    %1960 = vdwg.mxu0
    %1961 = vrot.lane.b32.xlu0 %v458, 120
    %v1962 = vpop.permute.xlu0 %1961
    %v1965 = vsel %vm782, %v1503, 0
    %1967 = vmatprep.subr.mxu0 0.0
    %1968 = vmatpush1.msra.mxu0 0.0
    %1969 = vmatprep.subr.mxu0 0.0
    %1970 = vmatpush1.msra.mxu0 0.0
    %1971 = vmatprep.subr.mxu0 0.0
    %1972 = vmatpush1.msra.mxu0 0.0
    %1973 = vmatprep.subr.mxu0 0.0
    %1974 = vmatpush1.msra.mxu0 0.0
    %1975 = vmatprep.subr.mxu0 0.0
    %1976 = vmatpush1.msra.mxu0 0.0
    %1977 = vmatprep.subr.mxu0 0.0
    %1978 = vmatpush1.msra.mxu0 0.0
    %1979 = vmatprep.subr.mxu0 0.0
    %1980 = vmatpush1.msra.mxu0 0.0
    %1981 = vmatprep.subr.mxu0 0.0
    %1982 = vmatpush1.msra.mxu0 0.0
    %1983 = vmatprep.subr.mxu0 0.0
    %1984 = vmatpush1.msra.mxu0 0.0
    %1985 = vmatprep.subr.mxu0 0.0
    %1986 = vmatpush1.msra.mxu0 0.0
    %1987 = vmatprep.subr.mxu0 0.0
    %1988 = vmatpush1.msra.mxu0 0.0
    %1989 = vmatprep.subr.mxu0 0.0
    %1990 = vmatpush1.msra.mxu0 0.0
    %1991 = vmatprep.subr.mxu0 0.0
    %1992 = vmatpush1.msra.mxu0 0.0
    %1993 = vmatprep.subr.mxu0 0.0
    %1994 = vmatpush1.msra.mxu0 0.0
    %1995 = vmatprep.subr.mxu0 0.0
    %1996 = vmatpush1.msra.mxu0 0.0
    %1997 = vmatprep.subr.mxu0 0.0
    %1998 = vmatpush1.msra.mxu0 %v1962
    %1999 = vmatprep.subr.mxu0 0.0
    %2000 = vmatpush2.msra.mxu0 0.0
    %2001 = vmatprep.subr.mxu0 0.0
    %2002 = vmatpush2.msra.mxu0 0.0
    %2003 = vmatprep.subr.mxu0 0.0
    %2004 = vmatpush2.msra.mxu0 0.0
    %2005 = vmatprep.subr.mxu0 0.0
    %2006 = vmatpush2.msra.mxu0 0.0
    %2007 = vmatprep.subr.mxu0 0.0
    %2008 = vmatpush2.msra.mxu0 0.0
    %2009 = vmatprep.subr.mxu0 0.0
    %2010 = vmatpush2.msra.mxu0 0.0
    %2011 = vmatprep.subr.mxu0 0.0
    %2012 = vmatpush2.msra.mxu0 0.0
    %2013 = vmatprep.subr.mxu0 0.0
    %2014 = vmatpush2.msra.mxu0 0.0
    %2015 = vmatprep.subr.mxu0 0.0
    %2016 = vmatpush2.msra.mxu0 0.0
    %2017 = vmatprep.subr.mxu0 0.0
    %2018 = vmatpush2.msra.mxu0 0.0
    %2019 = vmatprep.subr.mxu0 0.0
    %2020 = vmatpush2.msra.mxu0 0.0
    %2021 = vmatprep.subr.mxu0 0.0
    %2022 = vmatpush2.msra.mxu0 0.0
    %2023 = vmatprep.subr.mxu0 0.0
    %2024 = vmatpush2.msra.mxu0 0.0
    %2025 = vmatprep.subr.mxu0 0.0
    %2026 = vmatpush2.msra.mxu0 0.0
    %2027 = vmatprep.subr.mxu0 0.0
    %2028 = vmatpush2.msra.mxu0 0.0
    %2029 = vmatprep.subr.mxu0 0.0
    %2030 = vmatpush2.msra.mxu0 0.0
    %2031 = vmatprep.mubr.f32.mxu0 0.0
    %2032 = vmatmul.mubr.f32.gmra.mxu0 %v1965
    %v2033 = vpop.f32.mrf.mxu0
    %v2034 = vadd.f32 0.0, %v2033
    %v2035 = vpop.f32.mrf.mxu0
    %2036 = vdwg.mxu0
    %2037 = vrot.lane.b32.xlu0 %v459, 120
    %v2038 = vpop.permute.xlu0 %2037
    %v2041 = vsel %vm782, %v1504, 0
    %2043 = vmatprep.subr.mxu0 0.0
    %2044 = vmatpush1.msra.mxu0 0.0
    %2045 = vmatprep.subr.mxu0 0.0
    %2046 = vmatpush1.msra.mxu0 0.0
    %2047 = vmatprep.subr.mxu0 0.0
    %2048 = vmatpush1.msra.mxu0 0.0
    %2049 = vmatprep.subr.mxu0 0.0
    %2050 = vmatpush1.msra.mxu0 0.0
    %2051 = vmatprep.subr.mxu0 0.0
    %2052 = vmatpush1.msra.mxu0 0.0
    %2053 = vmatprep.subr.mxu0 0.0
    %2054 = vmatpush1.msra.mxu0 0.0
    %2055 = vmatprep.subr.mxu0 0.0
    %2056 = vmatpush1.msra.mxu0 0.0
    %2057 = vmatprep.subr.mxu0 0.0
    %2058 = vmatpush1.msra.mxu0 0.0
    %2059 = vmatprep.subr.mxu0 0.0
    %2060 = vmatpush1.msra.mxu0 0.0
    %2061 = vmatprep.subr.mxu0 0.0
    %2062 = vmatpush1.msra.mxu0 0.0
    %2063 = vmatprep.subr.mxu0 0.0
    %2064 = vmatpush1.msra.mxu0 0.0
    %2065 = vmatprep.subr.mxu0 0.0
    %2066 = vmatpush1.msra.mxu0 0.0
    %2067 = vmatprep.subr.mxu0 0.0
    %2068 = vmatpush1.msra.mxu0 0.0
    %2069 = vmatprep.subr.mxu0 0.0
    %2070 = vmatpush1.msra.mxu0 0.0
    %2071 = vmatprep.subr.mxu0 0.0
    %2072 = vmatpush1.msra.mxu0 0.0
    %2073 = vmatprep.subr.mxu0 0.0
    %2074 = vmatpush1.msra.mxu0 %v2038
    %2075 = vmatprep.subr.mxu0 0.0
    %2076 = vmatpush2.msra.mxu0 0.0
    %2077 = vmatprep.subr.mxu0 0.0
    %2078 = vmatpush2.msra.mxu0 0.0
    %2079 = vmatprep.subr.mxu0 0.0
    %2080 = vmatpush2.msra.mxu0 0.0
    %2081 = vmatprep.subr.mxu0 0.0
    %2082 = vmatpush2.msra.mxu0 0.0
    %2083 = vmatprep.subr.mxu0 0.0
    %2084 = vmatpush2.msra.mxu0 0.0
    %2085 = vmatprep.subr.mxu0 0.0
    %2086 = vmatpush2.msra.mxu0 0.0
    %2087 = vmatprep.subr.mxu0 0.0
    %2088 = vmatpush2.msra.mxu0 0.0
    %2089 = vmatprep.subr.mxu0 0.0
    %2090 = vmatpush2.msra.mxu0 0.0
    %2091 = vmatprep.subr.mxu0 0.0
    %2092 = vmatpush2.msra.mxu0 0.0
    %2093 = vmatprep.subr.mxu0 0.0
    %2094 = vmatpush2.msra.mxu0 0.0
    %2095 = vmatprep.subr.mxu0 0.0
    %2096 = vmatpush2.msra.mxu0 0.0
    %2097 = vmatprep.subr.mxu0 0.0
    %2098 = vmatpush2.msra.mxu0 0.0
    %2099 = vmatprep.subr.mxu0 0.0
    %2100 = vmatpush2.msra.mxu0 0.0
    %2101 = vmatprep.subr.mxu0 0.0
    %2102 = vmatpush2.msra.mxu0 0.0
    %2103 = vmatprep.subr.mxu0 0.0
    %2104 = vmatpush2.msra.mxu0 0.0
    %2105 = vmatprep.subr.mxu0 0.0
    %2106 = vmatpush2.msra.mxu0 0.0
    %2107 = vmatprep.mubr.f32.mxu0 0.0
    %2108 = vmatmul.mubr.f32.gmra.mxu0 %v2041
    %v2109 = vpop.f32.mrf.mxu0
    %v2110 = vadd.f32 0.0, %v2109
    %v2111 = vpop.f32.mrf.mxu0
    %2112 = vdwg.mxu0
    %v2113 = vcombine.low %v1578, %v1730
    %v2114 = vcombine.high %v1578, %v1730
    %v2116 = vunpack.c.l.s4 1983009808
    %v2117 = vunpack.c.0.s8 %v2116
    %v2118 = vlaneseq
    %v2119 = vshrl.u32 %v2118, 7
    %v2120 = vsub.s32 %v2117, %v2119
    %v2121 = vrot.slane %v2113, %v2120
    %v2123 = vunpack.c.l.s4 1983009808
    %v2124 = vunpack.c.0.s8 %v2123
    %v2125 = vlaneseq
    %v2126 = vshrl.u32 %v2125, 7
    %v2127 = vsub.s32 %v2124, %v2126
    %v2128 = vrot.slane %v2114, %v2127
    %v2129 = vcombine.low %v1654, %v1806
    %v2130 = vcombine.high %v1654, %v1806
    %v2132 = vunpack.c.l.s4 1983009808
    %v2133 = vunpack.c.0.s8 %v2132
    %v2134 = vlaneseq
    %v2135 = vshrl.u32 %v2134, 7
    %v2136 = vsub.s32 %v2133, %v2135
    %v2137 = vrot.slane %v2129, %v2136
    %v2139 = vunpack.c.l.s4 1983009808
    %v2140 = vunpack.c.0.s8 %v2139
    %v2141 = vlaneseq
    %v2142 = vshrl.u32 %v2141, 7
    %v2143 = vsub.s32 %v2140, %v2142
    %v2144 = vrot.slane %v2130, %v2143
    %v2145 = vcombine.low %v2121, %v2137
    %v2146 = vcombine.high %v2121, %v2137
    %v2148 = vunpack.c.l.s4 1934713408
    %v2149 = vunpack.c.0.s8 %v2148
    %v2150 = vlaneseq
    %v2151 = vshrl.u32 %v2150, 7
    %v2152 = vsub.s32 %v2149, %v2151
    %v2153 = vrot.slane %v2145, %v2152
    %v2155 = vunpack.c.l.s4 1934713408
    %v2156 = vunpack.c.0.s8 %v2155
    %v2157 = vlaneseq
    %v2158 = vshrl.u32 %v2157, 7
    %v2159 = vsub.s32 %v2156, %v2158
    %v2160 = vrot.slane %v2146, %v2159
    %v2161 = vcombine.low %v2128, %v2144
    %v2162 = vcombine.high %v2128, %v2144
    %v2164 = vunpack.c.l.s4 1934713408
    %v2165 = vunpack.c.0.s8 %v2164
    %v2166 = vlaneseq
    %v2167 = vshrl.u32 %v2166, 7
    %v2168 = vsub.s32 %v2165, %v2167
    %v2169 = vrot.slane %v2161, %v2168
    %v2171 = vunpack.c.l.s4 1934713408
    %v2172 = vunpack.c.0.s8 %v2171
    %v2173 = vlaneseq
    %v2174 = vshrl.u32 %v2173, 7
    %v2175 = vsub.s32 %v2172, %v2174
    %v2176 = vrot.slane %v2162, %v2175
    %v2177 = vcombine.high %v2153, 0.0
    %v2178 = vcombine.high %v2160, 0.0
    %v2179 = vcombine.high %v2169, 0.0
    %v2180 = vcombine.high %v2176, 0.0
    %v2181 = vcombine.low %v1882, %v2034
    %v2182 = vcombine.high %v1882, %v2034
    %v2184 = vunpack.c.l.s4 1983009808
    %v2185 = vunpack.c.0.s8 %v2184
    %v2186 = vlaneseq
    %v2187 = vshrl.u32 %v2186, 7
    %v2188 = vsub.s32 %v2185, %v2187
    %v2189 = vrot.slane %v2181, %v2188
    %v2191 = vunpack.c.l.s4 1983009808
    %v2192 = vunpack.c.0.s8 %v2191
    %v2193 = vlaneseq
    %v2194 = vshrl.u32 %v2193, 7
    %v2195 = vsub.s32 %v2192, %v2194
    %v2196 = vrot.slane %v2182, %v2195
    %v2197 = vcombine.low %v1958, %v2110
    %v2198 = vcombine.high %v1958, %v2110
    %v2200 = vunpack.c.l.s4 1983009808
    %v2201 = vunpack.c.0.s8 %v2200
    %v2202 = vlaneseq
    %v2203 = vshrl.u32 %v2202, 7
    %v2204 = vsub.s32 %v2201, %v2203
    %v2205 = vrot.slane %v2197, %v2204
    %v2207 = vunpack.c.l.s4 1983009808
    %v2208 = vunpack.c.0.s8 %v2207
    %v2209 = vlaneseq
    %v2210 = vshrl.u32 %v2209, 7
    %v2211 = vsub.s32 %v2208, %v2210
    %v2212 = vrot.slane %v2198, %v2211
    %v2213 = vcombine.low %v2189, %v2205
    %v2214 = vcombine.high %v2189, %v2205
    %v2216 = vunpack.c.l.s4 1934713408
    %v2217 = vunpack.c.0.s8 %v2216
    %v2218 = vlaneseq
    %v2219 = vshrl.u32 %v2218, 7
    %v2220 = vsub.s32 %v2217, %v2219
    %v2221 = vrot.slane %v2213, %v2220
    %v2223 = vunpack.c.l.s4 1934713408
    %v2224 = vunpack.c.0.s8 %v2223
    %v2225 = vlaneseq
    %v2226 = vshrl.u32 %v2225, 7
    %v2227 = vsub.s32 %v2224, %v2226
    %v2228 = vrot.slane %v2214, %v2227
    %v2229 = vcombine.low %v2196, %v2212
    %v2230 = vcombine.high %v2196, %v2212
    %v2232 = vunpack.c.l.s4 1934713408
    %v2233 = vunpack.c.0.s8 %v2232
    %v2234 = vlaneseq
    %v2235 = vshrl.u32 %v2234, 7
    %v2236 = vsub.s32 %v2233, %v2235
    %v2237 = vrot.slane %v2229, %v2236
    %v2239 = vunpack.c.l.s4 1934713408
    %v2240 = vunpack.c.0.s8 %v2239
    %v2241 = vlaneseq
    %v2242 = vshrl.u32 %v2241, 7
    %v2243 = vsub.s32 %v2240, %v2242
    %v2244 = vrot.slane %v2230, %v2243
    %v2245 = vcombine.high %v2221, 0.0
    %v2246 = vcombine.high %v2228, 0.0
    %v2247 = vcombine.high %v2237, 0.0
    %v2248 = vcombine.high %v2244, 0.0
    %v2249 = vcombine.low %v2153, %v2160
    %v2251 = vunpack.c.l.s4 1983009808
    %v2252 = vunpack.c.0.s8 %v2251
    %v2253 = vlaneseq
    %v2254 = vshrl.u32 %v2253, 7
    %v2255 = vsub.s32 %v2252, %v2254
    %v2256 = vrot.slane %v2249, %v2255
    %v2257 = vcombine.low %v2177, %v2178
    %v2259 = vunpack.c.l.s4 1983009808
    %v2260 = vunpack.c.0.s8 %v2259
    %v2261 = vlaneseq
    %v2262 = vshrl.u32 %v2261, 7
    %v2263 = vsub.s32 %v2260, %v2262
    %v2264 = vrot.slane %v2257, %v2263
    %v2265 = vcombine.low %v2169, %v2176
    %v2267 = vunpack.c.l.s4 1983009808
    %v2268 = vunpack.c.0.s8 %v2267
    %v2269 = vlaneseq
    %v2270 = vshrl.u32 %v2269, 7
    %v2271 = vsub.s32 %v2268, %v2270
    %v2272 = vrot.slane %v2265, %v2271
    %v2273 = vcombine.low %v2179, %v2180
    %v2275 = vunpack.c.l.s4 1983009808
    %v2276 = vunpack.c.0.s8 %v2275
    %v2277 = vlaneseq
    %v2278 = vshrl.u32 %v2277, 7
    %v2279 = vsub.s32 %v2276, %v2278
    %v2280 = vrot.slane %v2273, %v2279
    %v2281 = vcombine.low %v2256, %v2264
    %v2282 = vcombine.high %v2256, %v2264
    %v2284 = vunpack.c.l.s4 1934713408
    %v2285 = vunpack.c.0.s8 %v2284
    %v2286 = vlaneseq
    %v2287 = vshrl.u32 %v2286, 7
    %v2288 = vsub.s32 %v2285, %v2287
    %v2289 = vrot.slane %v2281, %v2288
    %v2291 = vunpack.c.l.s4 1934713408
    %v2292 = vunpack.c.0.s8 %v2291
    %v2293 = vlaneseq
    %v2294 = vshrl.u32 %v2293, 7
    %v2295 = vsub.s32 %v2292, %v2294
    %v2296 = vrot.slane %v2282, %v2295
    %v2297 = vcombine.low %v2272, %v2280
    %v2298 = vcombine.high %v2272, %v2280
    %v2300 = vunpack.c.l.s4 1934713408
    %v2301 = vunpack.c.0.s8 %v2300
    %v2302 = vlaneseq
    %v2303 = vshrl.u32 %v2302, 7
    %v2304 = vsub.s32 %v2301, %v2303
    %v2305 = vrot.slane %v2297, %v2304
    %v2307 = vunpack.c.l.s4 1934713408
    %v2308 = vunpack.c.0.s8 %v2307
    %v2309 = vlaneseq
    %v2310 = vshrl.u32 %v2309, 7
    %v2311 = vsub.s32 %v2308, %v2310
    %v2312 = vrot.slane %v2298, %v2311
    %v2313 = vcombine.low %v2289, %v2305
    %v2314 = vcombine.high %v2289, %v2305
    %v2315 = vcombine.low %v2296, %v2312
    %v2316 = vcombine.high %v2296, %v2312
    %v2317 = vcombine.low %v2221, %v2228
    %v2319 = vunpack.c.l.s4 1983009808
    %v2320 = vunpack.c.0.s8 %v2319
    %v2321 = vlaneseq
    %v2322 = vshrl.u32 %v2321, 7
    %v2323 = vsub.s32 %v2320, %v2322
    %v2324 = vrot.slane %v2317, %v2323
    %v2325 = vcombine.low %v2245, %v2246
    %v2327 = vunpack.c.l.s4 1983009808
    %v2328 = vunpack.c.0.s8 %v2327
    %v2329 = vlaneseq
    %v2330 = vshrl.u32 %v2329, 7
    %v2331 = vsub.s32 %v2328, %v2330
    %v2332 = vrot.slane %v2325, %v2331
    %v2333 = vcombine.low %v2237, %v2244
    %v2335 = vunpack.c.l.s4 1983009808
    %v2336 = vunpack.c.0.s8 %v2335
    %v2337 = vlaneseq
    %v2338 = vshrl.u32 %v2337, 7
    %v2339 = vsub.s32 %v2336, %v2338
    %v2340 = vrot.slane %v2333, %v2339
    %v2341 = vcombine.low %v2247, %v2248
    %v2343 = vunpack.c.l.s4 1983009808
    %v2344 = vunpack.c.0.s8 %v2343
    %v2345 = vlaneseq
    %v2346 = vshrl.u32 %v2345, 7
    %v2347 = vsub.s32 %v2344, %v2346
    %v2348 = vrot.slane %v2341, %v2347
    %v2349 = vcombine.low %v2324, %v2332
    %v2350 = vcombine.high %v2324, %v2332
    %v2352 = vunpack.c.l.s4 1934713408
    %v2353 = vunpack.c.0.s8 %v2352
    %v2354 = vlaneseq
    %v2355 = vshrl.u32 %v2354, 7
    %v2356 = vsub.s32 %v2353, %v2355
    %v2357 = vrot.slane %v2349, %v2356
    %v2359 = vunpack.c.l.s4 1934713408
    %v2360 = vunpack.c.0.s8 %v2359
    %v2361 = vlaneseq
    %v2362 = vshrl.u32 %v2361, 7
    %v2363 = vsub.s32 %v2360, %v2362
    %v2364 = vrot.slane %v2350, %v2363
    %v2365 = vcombine.low %v2340, %v2348
    %v2366 = vcombine.high %v2340, %v2348
    %v2368 = vunpack.c.l.s4 1934713408
    %v2369 = vunpack.c.0.s8 %v2368
    %v2370 = vlaneseq
    %v2371 = vshrl.u32 %v2370, 7
    %v2372 = vsub.s32 %v2369, %v2371
    %v2373 = vrot.slane %v2365, %v2372
    %v2375 = vunpack.c.l.s4 1934713408
    %v2376 = vunpack.c.0.s8 %v2375
    %v2377 = vlaneseq
    %v2378 = vshrl.u32 %v2377, 7
    %v2379 = vsub.s32 %v2376, %v2378
    %v2380 = vrot.slane %v2366, %v2379
    %v2381 = vcombine.low %v2357, %v2373
    %v2382 = vcombine.high %v2357, %v2373
    %v2383 = vcombine.low %v2364, %v2380
    %v2384 = vcombine.high %v2364, %v2380
    %2387 = vrot.lane.b32.xlu0 %v2314, 8
    %v2388 = vpop.permute.xlu0 %2387
    %2389 = vrot.lane.b32.xlu0 %v2382, 8
    %v2390 = vpop.permute.xlu0 %2389
    %2395 = vrot.lane.b32.xlu0 %v2315, 16
    %v2396 = vpop.permute.xlu0 %2395
    %2397 = vrot.lane.b32.xlu0 %v2383, 16
    %v2398 = vpop.permute.xlu0 %2397
    %2403 = vrot.lane.b32.xlu0 %v2316, 24
    %v2404 = vpop.permute.xlu0 %2403
    %2405 = vrot.lane.b32.xlu0 %v2384, 24
    %v2406 = vpop.permute.xlu0 %2405
    %v2409 = vsel %vm782, %v2313, %v2388
    %v2410 = vsel %vm782, %v2381, %v2390
    %vm2411 = vcmask 130048
    %v2412 = vsel %vm2411, %v2409, %v2396
    %v2413 = vsel %vm2411, %v2410, %v2398
    %vm2414 = vcmask 195584
    %v2415 = vsel %vm2414, %v2412, %v2404
    %v2416 = vsel %vm2414, %v2413, %v2406
    %2421 = vrot.lane.b32.xlu0 %v30, 32
    %v2422 = vpop.permute.xlu0 %2421
    %2423 = vrot.lane.b32.xlu0 %v32, 32
    %v2424 = vpop.permute.xlu0 %2423
    %2425 = vrot.lane.b32.xlu0 %v34, 32
    %v2426 = vpop.permute.xlu0 %2425
    %2427 = vrot.lane.b32.xlu0 %v36, 32
    %v2428 = vpop.permute.xlu0 %2427
    %2434 = vrot.lane.b32.xlu0 %v83, 32
    %v2435 = vpop.permute.xlu0 %2434
    %v2438 = vsel %vm40, %v2415, 0
    %v2441 = vsel %vm40, %v2416, 0
    %2443 = vmatprep.subr.mxu0 0.0
    %2444 = vmatpush1.msra.mxu0 0.0
    %2445 = vmatprep.subr.mxu0 0.0
    %2446 = vmatpush1.msra.mxu0 0.0
    %2447 = vmatprep.subr.mxu0 0.0
    %2448 = vmatpush1.msra.mxu0 0.0
    %2449 = vmatprep.subr.mxu0 0.0
    %2450 = vmatpush1.msra.mxu0 0.0
    %2451 = vmatprep.subr.mxu0 0.0
    %2452 = vmatpush1.msra.mxu0 0.0
    %2453 = vmatprep.subr.mxu0 0.0
    %2454 = vmatpush1.msra.mxu0 0.0
    %2455 = vmatprep.subr.mxu0 0.0
    %2456 = vmatpush1.msra.mxu0 0.0
    %2457 = vmatprep.subr.mxu0 0.0
    %2458 = vmatpush1.msra.mxu0 0.0
    %2459 = vmatprep.subr.mxu0 0.0
    %2460 = vmatpush1.msra.mxu0 0.0
    %2461 = vmatprep.subr.mxu0 0.0
    %2462 = vmatpush1.msra.mxu0 0.0
    %2463 = vmatprep.subr.mxu0 0.0
    %2464 = vmatpush1.msra.mxu0 0.0
    %2465 = vmatprep.subr.mxu0 0.0
    %2466 = vmatpush1.msra.mxu0 0.0
    %2467 = vmatprep.subr.mxu0 0.0
    %2468 = vmatpush1.msra.mxu0 %v2428
    %2469 = vmatprep.subr.mxu0 0.0
    %2470 = vmatpush1.msra.mxu0 %v2426
    %2471 = vmatprep.subr.mxu0 0.0
    %2472 = vmatpush1.msra.mxu0 %v2424
    %2473 = vmatprep.subr.mxu0 0.0
    %2474 = vmatpush1.msra.mxu0 %v2422
    %2475 = vmatprep.subr.mxu0 0.0
    %2476 = vmatpush2.msra.mxu0 0.0
    %2477 = vmatprep.subr.mxu0 0.0
    %2478 = vmatpush2.msra.mxu0 0.0
    %2479 = vmatprep.subr.mxu0 0.0
    %2480 = vmatpush2.msra.mxu0 0.0
    %2481 = vmatprep.subr.mxu0 0.0
    %2482 = vmatpush2.msra.mxu0 0.0
    %2483 = vmatprep.subr.mxu0 0.0
    %2484 = vmatpush2.msra.mxu0 0.0
    %2485 = vmatprep.subr.mxu0 0.0
    %2486 = vmatpush2.msra.mxu0 0.0
    %2487 = vmatprep.subr.mxu0 0.0
    %2488 = vmatpush2.msra.mxu0 0.0
    %2489 = vmatprep.subr.mxu0 0.0
    %2490 = vmatpush2.msra.mxu0 0.0
    %2491 = vmatprep.subr.mxu0 0.0
    %2492 = vmatpush2.msra.mxu0 0.0
    %2493 = vmatprep.subr.mxu0 0.0
    %2494 = vmatpush2.msra.mxu0 0.0
    %2495 = vmatprep.subr.mxu0 0.0
    %2496 = vmatpush2.msra.mxu0 0.0
    %2497 = vmatprep.subr.mxu0 0.0
    %2498 = vmatpush2.msra.mxu0 0.0
    %2499 = vmatprep.subr.mxu0 0.0
    %2500 = vmatpush2.msra.mxu0 0.0
    %2501 = vmatprep.subr.mxu0 0.0
    %2502 = vmatpush2.msra.mxu0 0.0
    %2503 = vmatprep.subr.mxu0 0.0
    %2504 = vmatpush2.msra.mxu0 0.0
    %2505 = vmatprep.subr.mxu0 0.0
    %2506 = vmatpush2.msra.mxu0 0.0
    %2507 = vmatprep.mubr.f32.mxu0 0.0
    %2508 = vmatmul.mubr.f32.gmra.mxu0 %v2438
    %v2509 = vpop.f32.mrf.mxu0
    %v2510 = vadd.f32 %v2435, %v2509
    %v2511 = vpop.f32.mrf.mxu0
    %2512 = vmatprep.mubr.f32.mxu0 0.0
    %2513 = vmatmul.mubr.f32.gmra.mxu0 %v2441
    %v2514 = vpop.f32.mrf.mxu0
    %v2515 = vadd.f32 %v2435, %v2514
    %v2516 = vpop.f32.mrf.mxu0
    %2517 = vdwg.mxu0
    %v2518 = vadd.f32 %v28, %v2510
    %v2519 = vadd.f32 %v29, %v2515
    %v2520 = vsel %vm40, %v2518, 0.0
    %2521 = vadd.xlane.f32.xlu0 %v2520
    %v2522 = vpop.xlane.xlu0 %2521
    %v2523 = vsel %vm40, %v2519, 0.0
    %2524 = vadd.xlane.f32.xlu0 %v2523
    %v2525 = vpop.xlane.xlu0 %2524
    %v2526 = vmul.f32 %v2522, %v47
    %v2527 = vmul.f32 %v2525, %v47
    %v2528 = vsub.f32 %v2518, %v2526
    %v2529 = vsub.f32 %v2519, %v2527
    %v2530 = vmul.f32 %v2528, %v2528
    %v2531 = vmul.f32 %v2529, %v2529
    %v2532 = vsel %vm40, %v2530, 0.0
    %2533 = vadd.xlane.f32.xlu0 %v2532
    %v2534 = vpop.xlane.xlu0 %2533
    %v2535 = vsel %vm40, %v2531, 0.0
    %2536 = vadd.xlane.f32.xlu0 %v2535
    %v2537 = vpop.xlane.xlu0 %2536
    %v2538 = vmul.f32 %v2534, %v47
    %v2539 = vmul.f32 %v2537, %v47
    %v2540 = vadd.f32 %v2538, 1e-05
    %v2541 = vadd.f32 %v2539, 1e-05
    %v2542 = vrsqrt.pop %v2540
    %v2543 = vrsqrt.pop %v2541
    %v2544 = vmul.f32 %v2528, %v2542
    %v2545 = vmul.f32 %v2529, %v2543
    %v2546 = vlaneseq
    %v2547 = vshrl.u32 %v2546, 7
    %v2548 = vsub.s32 3, %v2547
    %v2549 = vrot.slane %v38, %v2548
    %v2550 = vmul.f32 %v2544, %v2549
    %v2551 = vmul.f32 %v2545, %v2549
    %v2552 = vlaneseq
    %v2553 = vshrl.u32 %v2552, 7
    %v2554 = vsub.s32 4, %v2553
    %v2555 = vrot.slane %v38, %v2554
    %v2556 = vadd.f32 %v2550, %v2555
    %v2557 = vadd.f32 %v2551, %v2555
    %v2558 = vlaneseq
    %v2559 = vshrl.u32 %v2558, 7
    %v2560 = vsub.s32 0, %v2559
    %v2561 = vrot.slane %v39, %v2560
    %v2563 = vsel %vm40, %v2556, 0
    %v2566 = vsel %vm40, %v2557, 0
    %2568 = vmatprep.subr.mxu0 0.0
    %2569 = vmatpush1.msra.mxu0 0.0
    %2570 = vmatprep.subr.mxu0 0.0
    %2571 = vmatpush1.msra.mxu0 0.0
    %2572 = vmatprep.subr.mxu0 0.0
    %2573 = vmatpush1.msra.mxu0 0.0
    %2574 = vmatprep.subr.mxu0 0.0
    %2575 = vmatpush1.msra.mxu0 0.0
    %2576 = vmatprep.subr.mxu0 0.0
    %2577 = vmatpush1.msra.mxu0 0.0
    %2578 = vmatprep.subr.mxu0 0.0
    %2579 = vmatpush1.msra.mxu0 0.0
    %2580 = vmatprep.subr.mxu0 0.0
    %2581 = vmatpush1.msra.mxu0 0.0
    %2582 = vmatprep.subr.mxu0 0.0
    %2583 = vmatpush1.msra.mxu0 0.0
    %2584 = vmatprep.subr.mxu0 0.0
    %2585 = vmatpush1.msra.mxu0 0.0
    %2586 = vmatprep.subr.mxu0 0.0
    %2587 = vmatpush1.msra.mxu0 0.0
    %2588 = vmatprep.subr.mxu0 0.0
    %2589 = vmatpush1.msra.mxu0 0.0
    %2590 = vmatprep.subr.mxu0 0.0
    %2591 = vmatpush1.msra.mxu0 0.0
    %2592 = vmatprep.subr.mxu0 0.0
    %2593 = vmatpush1.msra.mxu0 %v37
    %2594 = vmatprep.subr.mxu0 0.0
    %2595 = vmatpush1.msra.mxu0 %v35
    %2596 = vmatprep.subr.mxu0 0.0
    %2597 = vmatpush1.msra.mxu0 %v33
    %2598 = vmatprep.subr.mxu0 0.0
    %2599 = vmatpush1.msra.mxu0 %v31
    %2600 = vmatprep.subr.mxu0 0.0
    %2601 = vmatpush2.msra.mxu0 0.0
    %2602 = vmatprep.subr.mxu0 0.0
    %2603 = vmatpush2.msra.mxu0 0.0
    %2604 = vmatprep.subr.mxu0 0.0
    %2605 = vmatpush2.msra.mxu0 0.0
    %2606 = vmatprep.subr.mxu0 0.0
    %2607 = vmatpush2.msra.mxu0 0.0
    %2608 = vmatprep.subr.mxu0 0.0
    %2609 = vmatpush2.msra.mxu0 0.0
    %2610 = vmatprep.subr.mxu0 0.0
    %2611 = vmatpush2.msra.mxu0 0.0
    %2612 = vmatprep.subr.mxu0 0.0
    %2613 = vmatpush2.msra.mxu0 0.0
    %2614 = vmatprep.subr.mxu0 0.0
    %2615 = vmatpush2.msra.mxu0 0.0
    %2616 = vmatprep.subr.mxu0 0.0
    %2617 = vmatpush2.msra.mxu0 0.0
    %2618 = vmatprep.subr.mxu0 0.0
    %2619 = vmatpush2.msra.mxu0 0.0
    %2620 = vmatprep.subr.mxu0 0.0
    %2621 = vmatpush2.msra.mxu0 0.0
    %2622 = vmatprep.subr.mxu0 0.0
    %2623 = vmatpush2.msra.mxu0 0.0
    %2624 = vmatprep.subr.mxu0 0.0
    %2625 = vmatpush2.msra.mxu0 0.0
    %2626 = vmatprep.subr.mxu0 0.0
    %2627 = vmatpush2.msra.mxu0 0.0
    %2628 = vmatprep.subr.mxu0 0.0
    %2629 = vmatpush2.msra.mxu0 0.0
    %2630 = vmatprep.subr.mxu0 0.0
    %2631 = vmatpush2.msra.mxu0 0.0
    %2632 = vmatprep.mubr.f32.mxu0 0.0
    %2633 = vmatmul.mubr.f32.gmra.mxu0 %v2563
    %v2634 = vpop.f32.mrf.mxu0
    %v2635 = vadd.f32 %v2561, %v2634
    %v2636 = vpop.f32.mrf.mxu0
    %2637 = vmatprep.mubr.f32.mxu0 0.0
    %2638 = vmatmul.mubr.f32.gmra.mxu0 %v2566
    %v2639 = vpop.f32.mrf.mxu0
    %v2640 = vadd.f32 %v2561, %v2639
    %v2641 = vpop.f32.mrf.mxu0
    %2642 = vdwg.mxu0
    %v2643 = vmax.f32 %v2635, 0.0
    %v2644 = vmax.f32 %v2640, 0.0
    %v2645 = vld [vmem:[%s3] sm:$0xff]
    %v2646 = vld [vmem:[%s3 + $0x8] sm:$0xff]
    %v2647 = vld [vmem:[%s3 + $0x10] sm:$0xff]
    %v2648 = vld [vmem:[%s3 + $0x18] sm:$0xff]
    %v2649 = vld [vmem:[%s3 + $0x20] sm:$0xff]
    %v2650 = vld [vmem:[%s3 + $0x28] sm:$0xff]
    %v2651 = vld [vmem:[%s3 + $0x30] sm:$0xff]
    %v2652 = vld [vmem:[%s3 + $0x38] sm:$0xff]
    %v2653 = vlaneseq
    %v2654 = vshrl.u32 %v2653, 7
    %v2655 = vsub.s32 5, %v2654
    %v2656 = vrot.slane %v38, %v2655
    %v2658 = vsel %vm165, %v2643, 0
    %v2661 = vsel %vm165, %v2644, 0
    %2663 = vmatprep.subr.mxu0 0.0
    %2664 = vmatpush1.msra.mxu0 0.0
    %2665 = vmatprep.subr.mxu0 0.0
    %2666 = vmatpush1.msra.mxu0 0.0
    %2667 = vmatprep.subr.mxu0 0.0
    %2668 = vmatpush1.msra.mxu0 0.0
    %2669 = vmatprep.subr.mxu0 0.0
    %2670 = vmatpush1.msra.mxu0 0.0
    %2671 = vmatprep.subr.mxu0 0.0
    %2672 = vmatpush1.msra.mxu0 0.0
    %2673 = vmatprep.subr.mxu0 0.0
    %2674 = vmatpush1.msra.mxu0 0.0
    %2675 = vmatprep.subr.mxu0 0.0
    %2676 = vmatpush1.msra.mxu0 0.0
    %2677 = vmatprep.subr.mxu0 0.0
    %2678 = vmatpush1.msra.mxu0 0.0
    %2679 = vmatprep.subr.mxu0 0.0
    %2680 = vmatpush1.msra.mxu0 %v2652
    %2681 = vmatprep.subr.mxu0 0.0
    %2682 = vmatpush1.msra.mxu0 %v2651
    %2683 = vmatprep.subr.mxu0 0.0
    %2684 = vmatpush1.msra.mxu0 %v2650
    %2685 = vmatprep.subr.mxu0 0.0
    %2686 = vmatpush1.msra.mxu0 %v2649
    %2687 = vmatprep.subr.mxu0 0.0
    %2688 = vmatpush1.msra.mxu0 %v2648
    %2689 = vmatprep.subr.mxu0 0.0
    %2690 = vmatpush1.msra.mxu0 %v2647
    %2691 = vmatprep.subr.mxu0 0.0
    %2692 = vmatpush1.msra.mxu0 %v2646
    %2693 = vmatprep.subr.mxu0 0.0
    %2694 = vmatpush1.msra.mxu0 %v2645
    %2695 = vmatprep.subr.mxu0 0.0
    %2696 = vmatpush2.msra.mxu0 0.0
    %2697 = vmatprep.subr.mxu0 0.0
    %2698 = vmatpush2.msra.mxu0 0.0
    %2699 = vmatprep.subr.mxu0 0.0
    %2700 = vmatpush2.msra.mxu0 0.0
    %2701 = vmatprep.subr.mxu0 0.0
    %2702 = vmatpush2.msra.mxu0 0.0
    %2703 = vmatprep.subr.mxu0 0.0
    %2704 = vmatpush2.msra.mxu0 0.0
    %2705 = vmatprep.subr.mxu0 0.0
    %2706 = vmatpush2.msra.mxu0 0.0
    %2707 = vmatprep.subr.mxu0 0.0
    %2708 = vmatpush2.msra.mxu0 0.0
    %2709 = vmatprep.subr.mxu0 0.0
    %2710 = vmatpush2.msra.mxu0 0.0
    %2711 = vmatprep.subr.mxu0 0.0
    %2712 = vmatpush2.msra.mxu0 0.0
    %2713 = vmatprep.subr.mxu0 0.0
    %2714 = vmatpush2.msra.mxu0 0.0
    %2715 = vmatprep.subr.mxu0 0.0
    %2716 = vmatpush2.msra.mxu0 0.0
    %2717 = vmatprep.subr.mxu0 0.0
    %2718 = vmatpush2.msra.mxu0 0.0
    %2719 = vmatprep.subr.mxu0 0.0
    %2720 = vmatpush2.msra.mxu0 0.0
    %2721 = vmatprep.subr.mxu0 0.0
    %2722 = vmatpush2.msra.mxu0 0.0
    %2723 = vmatprep.subr.mxu0 0.0
    %2724 = vmatpush2.msra.mxu0 0.0
    %2725 = vmatprep.subr.mxu0 0.0
    %2726 = vmatpush2.msra.mxu0 0.0
    %2727 = vmatprep.mubr.f32.mxu0 0.0
    %2728 = vmatmul.mubr.f32.gmra.mxu0 %v2658
    %v2729 = vpop.f32.mrf.mxu0
    %v2730 = vadd.f32 %v2656, %v2729
    %v2731 = vpop.f32.mrf.mxu0
    %2732 = vmatprep.mubr.f32.mxu0 0.0
    %2733 = vmatmul.mubr.f32.gmra.mxu0 %v2661
    %v2734 = vpop.f32.mrf.mxu0
    %v2735 = vadd.f32 %v2656, %v2734
    %v2736 = vpop.f32.mrf.mxu0
    %2737 = vdwg.mxu0
    %v2738 = vadd.f32 %v2518, %v2730
    %v2739 = vadd.f32 %v2519, %v2735
    %2740 = vst.msk [vmem:[#allocation4] sm:$0xff] %vm40, %v2738
    %2741 = vst.msk [vmem:[#allocation4 + $0x8] sm:$0xff] %vm40, %v2739
    // Predicated region
    $region18: #{tpu_custom_call.1} parent=1 // pred_check
      _
    $region19: #{tpu_custom_call.1} parent=1 // pred_check_branch
      %2743 = sbr.rel (0) target = $region21
    $region20: #{tpu_custom_call.1} parent=1 // pred_region
      %s2745 = ssub.s32 256, 256
      %2746 = vsyncadd [#allocation5], %s2745
      %s2747 = sshll.u32 [#allocation4], 4
      %s2748 = int_to_ptr.vmem [resolvable:$true] %s2747
      %2753 = dma.vmem_to_hbm [thread:$0]  %s2748, 256, %s5, [#allocation5], 128, 128, 8
    $region21: #{tpu_custom_call.1} parent=1 // pred_fallthru
      _
    // Predicated region
    $region22: #{tpu_custom_call.1} parent=1 // pred_check
      _
    $region23: #{tpu_custom_call.1} parent=1 // pred_check_branch
      %2755 = sbr.rel (0) target = $region25
    $region24: #{tpu_custom_call.1} parent=1 // pred_region
      %s2757 = ssub.s32 256, 256
      %2758 = vsyncadd [#allocation7], %s2757
      %s2759 = sshll.u32 [#allocation6], 4
      %s2760 = int_to_ptr.vmem [resolvable:$true] %s2759
      %2765 = dma.vmem_to_hbm [thread:$0]  %s2760, 256, %s6, [#allocation7], 128, 128, 8
    $region25: #{tpu_custom_call.1} parent=1 // pred_fallthru
      _
    // Predicated region
    $region26: #{tpu_custom_call.1} parent=1 // pred_check
      _
    $region27: #{tpu_custom_call.1} parent=1 // pred_check_branch
      %2767 = sbr.rel (0) target = $region29
    $region28: #{tpu_custom_call.1} parent=1 // pred_region
      %2768 = dma.done [#allocation5], 256
    $region29: #{tpu_custom_call.1} parent=1 // pred_fallthru
      _
    // Predicated region
    $region30: #{tpu_custom_call.1} parent=1 // pred_check
      _
    $region31: #{tpu_custom_call.1} parent=1 // pred_check_branch
      %2770 = sbr.rel (0) target = $region33
    $region32: #{tpu_custom_call.1} parent=1 // pred_region
      %2771 = dma.done [#allocation7], 256
    $region33: #{tpu_custom_call.1} parent=1 // pred_fallthru
      _
    %2772 = vsyncpa [#allocation5], 1
    %2773 = vsyncpa [#allocation7], 1

</llo_original>
